<compile_context>
chip_gen: v6e
topology: v6e:2x2x1
jax: 0.10.0
libtpu: 0.0.40
codegen_flags: <defaults>
</compile_context>

<pallas_src>
import jax
import jax.numpy as jnp
import numpy as np
from jax.experimental import pallas as pl
from jax.experimental.pallas import tpu as pltpu

CI, CO = 3, 15
KH, KW = 7, 9
STRIDE = 3
PAD = 3
OUT_PAD = 2
# TODO(synk): the PyTorch forward reads self.negative_slope, which __init__
# never assigns (it would raise AttributeError at runtime); we use the
# constructor default negative_slope=1, so where(x>0, x, x*1) is the identity
# and the select is elided (re-enabled automatically if NEG_SLOPE is changed).
NEG_SLOPE = 1.0

K_DIM = 3 * 3 * CI              # 27 useful taps per output pixel after the polyphase split
M_OUT = STRIDE * STRIDE * CO    # 135 = (ph, pw, co) rows of the kernel output
NB_PER_STEP = 4                 # images per grid step (amortizes ~0.35us/step overhead)


def prepare_weights(w, b):
    """(CI,CO,KH,KW) ConvTranspose2d weights + (CO,) bias -> (135, 28) constant.

    Call ONCE per model (hoisted off the per-forward hot path); the result is a
    constant that lives next to the weights."""
    # spatially flipped weights indexed [kh, kw, ci, co] (correlation form)
    wflip = jnp.transpose(jnp.flip(w, axis=(2, 3)), (2, 3, 0, 1))
    u, v, ci, ph, pw, co = np.meshgrid(
        np.arange(3), np.arange(3), np.arange(CI),
        np.arange(3), np.arange(3), np.arange(CO), indexing="ij")
    kh = 3 * u - ph              # flipped-kernel row tap used by row-phase ph
    kw = 3 * v + 2 - pw          # flipped-kernel col tap used by col-phase pw
    ok = kh >= 0                 # taps falling outside the 7-row kernel are zero
    vals = wflip[np.where(ok, kh, 0), kw, ci, co]
    vals = jnp.where(jnp.asarray(ok), vals, 0.0)
    # rows: (u*3+v)*CI+ci   cols: (ph*3+pw)*CO+co
    w_mat = jnp.transpose(vals.reshape(K_DIM, M_OUT))               # (135, 27)
    b_col = jnp.tile(b, STRIDE * STRIDE).reshape(M_OUT, 1)          # bias per (ph,pw,co)
    return jnp.concatenate([w_mat, b_col], axis=1)                  # (135, 28)


def _convt_kernel(a_ref, w_ref, o_ref):
    """a_ref: (NB, 28, L) im2col patches + ones row; w_ref: (135, 28) weights
    with bias folded in; o_ref: (NB, 135, L).  One MXU matmul per image."""
    for n in range(NB_PER_STEP):                 # static unroll over the batch block
        acc = jnp.dot(w_ref[...], a_ref[n], preferred_element_type=jnp.float32)
        if NEG_SLOPE != 1.0:                     # identity for this module's slope
            acc = jnp.where(acc > 0, acc, acc * NEG_SLOPE)
        o_ref[n] = acc.astype(o_ref.dtype)


@jax.jit
def model_forward(x, w_aug):
    """x: (N, CI, H, W) f32; w_aug: (135, 28) precomputed weight+bias matrix."""
    N, ci, H, W = x.shape
    assert ci == CI and w_aug.shape == (M_OUT, K_DIM + 1)
    OH = (H - 1) * STRIDE - 2 * PAD + (KH - 1) + OUT_PAD + 1     # = 3*H
    OW = (W - 1) * STRIDE - 2 * PAD + (KW - 1) + OUT_PAD + 1     # = 3*W + 2
    A = H                                   # per-phase rows
    Bp = W + 1                              # per-phase cols; pad so A*Bp % 128 == 0
    while (A * Bp) % 128 != 0 and Bp < W + 1 + 128:
        Bp += 1
    if (A * Bp) % 128 != 0:
        Bp = W + 1                          # fallback: still correct (full-dim blocks)
    L = A * Bp                              # lane dim (384 for 16x16 inputs)

    # --- glue (fused under jit): 3x3 im2col of the padded input + ones row ---
    xp = jnp.pad(x, ((0, 0), (0, 0), (1, 1), (1, Bp + 1 - W)))
    patches = [xp[:, :, u:u + A, v:v + Bp] for u in range(3) for v in range(3)]
    at = jnp.stack(patches, axis=1).reshape(N, K_DIM, L)              # (N, 27, L)
    at = jnp.concatenate([at, jnp.ones((N, 1, L), at.dtype)], axis=1)  # bias row -> 28

    # --- block the batch: NB_PER_STEP images per grid step -------------------
    npad = pl.cdiv(N, NB_PER_STEP) * NB_PER_STEP
    if npad != N:
        at = jnp.pad(at, ((0, npad - N), (0, 0), (0, 0)))

    out = pl.pallas_call(
        _convt_kernel,
        out_shape=jax.ShapeDtypeStruct((npad, M_OUT, L), x.dtype),
        grid=(npad // NB_PER_STEP,),
        in_specs=[
            pl.BlockSpec((NB_PER_STEP, K_DIM + 1, L), lambda i: (i, 0, 0)),
            pl.BlockSpec((M_OUT, K_DIM + 1), lambda i: (0, 0)),
        ],
        out_specs=pl.BlockSpec((NB_PER_STEP, M_OUT, L), lambda i: (i, 0, 0)),
        compiler_params=pltpu.CompilerParams(dimension_semantics=("parallel",)),
    )(at, w_aug)

    # --- glue (layout only): de-interleave 3x3 phases back into NCHW ---------
    out = out[:N].reshape(N, STRIDE, STRIDE, CO, A, Bp)     # (n, ph, pw, co, a, b)
    out = jnp.transpose(out, (0, 3, 4, 1, 5, 2))            # (n, co, a, ph, b, pw)
    out = out.reshape(N, CO, STRIDE * A, STRIDE * Bp)[:, :, :OH, :OW]
    return out


if __name__ == "__main__":
    key = jax.random.PRNGKey(0)
    kx, kw_, kb = jax.random.split(key, 3)
    N, H, W = 8, 16, 16   # matches the original module's input (8, 3, 16, 16)
    x = jax.random.normal(kx, (N, CI, H, W), jnp.float32)
    w = jax.random.normal(kw_, (CI, CO, KH, KW), jnp.float32) * 0.05
    b = jax.random.normal(kb, (CO,), jnp.float32) * 0.05

    w_aug = jax.block_until_ready(prepare_weights(w, b))   # one-time, off hot path
    out = jax.block_until_ready(model_forward(x, w_aug))

    # Reference: transposed conv via lhs-dilated conv_general_dilated + bias + where.
    rhs = jnp.transpose(jnp.flip(w, axis=(2, 3)), (1, 0, 2, 3))  # (CO, CI, KH, KW)
    ref = jax.lax.conv_general_dilated(
        x, rhs, window_strides=(1, 1),
        padding=((KH - 1 - PAD, KH - 1 - PAD + OUT_PAD),
                 (KW - 1 - PAD, KW - 1 - PAD + OUT_PAD)),
        lhs_dilation=(STRIDE, STRIDE), rhs_dilation=(1, 1),
        dimension_numbers=("NCHW", "OIHW", "NCHW"))
    ref = ref + b[None, :, None, None]
    ref = jnp.where(ref > 0, ref, ref * NEG_SLOPE)

    assert out.shape == (N, CO, 48, 50), out.shape
    err = float(jnp.max(jnp.abs(out - ref)))
    assert err < 1e-4, f"max abs err {err}"
    print("KERNEL_OK")
</pallas_src>

<mosaic_0001>
module attributes {stable_mosaic.version = 11 : i64} {
  func.func @_convt_kernel(%arg0: i32, %arg1: memref<4x28x384xf32, #tpu.memory_space<vmem>>, %arg2: memref<135x28xf32, #tpu.memory_space<vmem>>, %arg3: memref<4x135x384xf32, #tpu.memory_space<vmem>>) attributes {dimension_semantics = [#tpu.dimension_semantics<parallel>], iteration_bounds = array<i64: 2>, scalar_prefetch = 0 : i64, scratch_operands = 0 : i64, tpu.core_type = #tpu.core_type<tc>, window_params = [{transform_indices = @transform_0, window_bounds = array<i64: 4, 28, 384>}, {pipeline_mode = #tpu.pipeline_mode<synchronous>, transform_indices = @transform_1, window_bounds = array<i64: 135, 28>}, {transform_indices = @transform_2, window_bounds = array<i64: 4, 135, 384>}]} {
    %c0 = arith.constant 0 : index
    %c0_0 = arith.constant 0 : index
    %0 = vector.load %arg2[%c0, %c0_0] : memref<135x28xf32, #tpu.memory_space<vmem>>, vector<135x28xf32>
    %c0_1 = arith.constant 0 : index
    %c0_2 = arith.constant 0 : index
    %c0_3 = arith.constant 0 : index
    %1 = vector.load %arg1[%c0_1, %c0_2, %c0_3] : memref<4x28x384xf32, #tpu.memory_space<vmem>>, vector<1x28x384xf32>
    %2 = vector.shape_cast %1 : vector<1x28x384xf32> to vector<28x384xf32>
    %cst = arith.constant dense<0.000000e+00> : vector<135x384xf32>
    %3 = tpu.matmul %0, %2, %cst {dimension_numbers = #tpu.dot_dimension_numbers<[1], [0], [0], [1], [0, 0, 1, 1], [], []>} : vector<135x28xf32>, vector<28x384xf32>, vector<135x384xf32> -> vector<135x384xf32>
    %c0_4 = arith.constant 0 : index
    %c0_5 = arith.constant 0 : index
    %c0_6 = arith.constant 0 : index
    %4 = vector.load %arg3[%c0_4, %c0_5, %c0_6] : memref<4x135x384xf32, #tpu.memory_space<vmem>>, vector<1x135x384xf32>
    %5 = vector.shape_cast %4 : vector<1x135x384xf32> to vector<135x384xf32>
    %6 = vector.shape_cast %3 : vector<135x384xf32> to vector<1x135x384xf32>
    tpu.vector_store %arg3[%c0_4, %c0_5, %c0_6], %6 {strides = array<i32>} : memref<4x135x384xf32, #tpu.memory_space<vmem>>, vector<1x135x384xf32>,
    %c0_7 = arith.constant 0 : index
    %c0_8 = arith.constant 0 : index
    %7 = vector.load %arg2[%c0_7, %c0_8] : memref<135x28xf32, #tpu.memory_space<vmem>>, vector<135x28xf32>
    %c1 = arith.constant 1 : index
    %c0_9 = arith.constant 0 : index
    %c0_10 = arith.constant 0 : index
    %8 = vector.load %arg1[%c1, %c0_9, %c0_10] : memref<4x28x384xf32, #tpu.memory_space<vmem>>, vector<1x28x384xf32>
    %9 = vector.shape_cast %8 : vector<1x28x384xf32> to vector<28x384xf32>
    %cst_11 = arith.constant dense<0.000000e+00> : vector<135x384xf32>
    %10 = tpu.matmul %7, %9, %cst_11 {dimension_numbers = #tpu.dot_dimension_numbers<[1], [0], [0], [1], [0, 0, 1, 1], [], []>} : vector<135x28xf32>, vector<28x384xf32>, vector<135x384xf32> -> vector<135x384xf32>
    %c1_12 = arith.constant 1 : index
    %c0_13 = arith.constant 0 : index
    %c0_14 = arith.constant 0 : index
    %11 = vector.load %arg3[%c1_12, %c0_13, %c0_14] : memref<4x135x384xf32, #tpu.memory_space<vmem>>, vector<1x135x384xf32>
    %12 = vector.shape_cast %11 : vector<1x135x384xf32> to vector<135x384xf32>
    %13 = vector.shape_cast %10 : vector<135x384xf32> to vector<1x135x384xf32>
    tpu.vector_store %arg3[%c1_12, %c0_13, %c0_14], %13 {strides = array<i32>} : memref<4x135x384xf32, #tpu.memory_space<vmem>>, vector<1x135x384xf32>,
    %c0_15 = arith.constant 0 : index
    %c0_16 = arith.constant 0 : index
    %14 = vector.load %arg2[%c0_15, %c0_16] : memref<135x28xf32, #tpu.memory_space<vmem>>, vector<135x28xf32>
    %c2 = arith.constant 2 : index
    %c0_17 = arith.constant 0 : index
    %c0_18 = arith.constant 0 : index
    %15 = vector.load %arg1[%c2, %c0_17, %c0_18] : memref<4x28x384xf32, #tpu.memory_space<vmem>>, vector<1x28x384xf32>
    %16 = vector.shape_cast %15 : vector<1x28x384xf32> to vector<28x384xf32>
    %cst_19 = arith.constant dense<0.000000e+00> : vector<135x384xf32>
    %17 = tpu.matmul %14, %16, %cst_19 {dimension_numbers = #tpu.dot_dimension_numbers<[1], [0], [0], [1], [0, 0, 1, 1], [], []>} : vector<135x28xf32>, vector<28x384xf32>, vector<135x384xf32> -> vector<135x384xf32>
    %c2_20 = arith.constant 2 : index
    %c0_21 = arith.constant 0 : index
    %c0_22 = arith.constant 0 : index
    %18 = vector.load %arg3[%c2_20, %c0_21, %c0_22] : memref<4x135x384xf32, #tpu.memory_space<vmem>>, vector<1x135x384xf32>
    %19 = vector.shape_cast %18 : vector<1x135x384xf32> to vector<135x384xf32>
    %20 = vector.shape_cast %17 : vector<135x384xf32> to vector<1x135x384xf32>
    tpu.vector_store %arg3[%c2_20, %c0_21, %c0_22], %20 {strides = array<i32>} : memref<4x135x384xf32, #tpu.memory_space<vmem>>, vector<1x135x384xf32>,
    %c0_23 = arith.constant 0 : index
    %c0_24 = arith.constant 0 : index
    %21 = vector.load %arg2[%c0_23, %c0_24] : memref<135x28xf32, #tpu.memory_space<vmem>>, vector<135x28xf32>
    %c3 = arith.constant 3 : index
    %c0_25 = arith.constant 0 : index
    %c0_26 = arith.constant 0 : index
    %22 = vector.load %arg1[%c3, %c0_25, %c0_26] : memref<4x28x384xf32, #tpu.memory_space<vmem>>, vector<1x28x384xf32>
    %23 = vector.shape_cast %22 : vector<1x28x384xf32> to vector<28x384xf32>
    %cst_27 = arith.constant dense<0.000000e+00> : vector<135x384xf32>
    %24 = tpu.matmul %21, %23, %cst_27 {dimension_numbers = #tpu.dot_dimension_numbers<[1], [0], [0], [1], [0, 0, 1, 1], [], []>} : vector<135x28xf32>, vector<28x384xf32>, vector<135x384xf32> -> vector<135x384xf32>
    %c3_28 = arith.constant 3 : index
    %c0_29 = arith.constant 0 : index
    %c0_30 = arith.constant 0 : index
    %25 = vector.load %arg3[%c3_28, %c0_29, %c0_30] : memref<4x135x384xf32, #tpu.memory_space<vmem>>, vector<1x135x384xf32>
    %26 = vector.shape_cast %25 : vector<1x135x384xf32> to vector<135x384xf32>
    %27 = vector.shape_cast %24 : vector<135x384xf32> to vector<1x135x384xf32>
    tpu.vector_store %arg3[%c3_28, %c0_29, %c0_30], %27 {strides = array<i32>} : memref<4x135x384xf32, #tpu.memory_space<vmem>>, vector<1x135x384xf32>,
    return
  }
  func.func @transform_0(%arg0: i32) -> (i32, i32, i32) {
    %c0_i32 = arith.constant 0 : i32
    %c0_i32_0 = arith.constant 0 : i32
    %c0_i32_1 = arith.constant 0 : i32
    return %arg0, %c0_i32, %c0_i32_0 : i32, i32, i32
  }
  func.func @transform_1(%arg0: i32) -> (i32, i32) {
    %c0_i32 = arith.constant 0 : i32
    %c0_i32_0 = arith.constant 0 : i32
    %c0_i32_1 = arith.constant 0 : i32
    return %c0_i32, %c0_i32_0 : i32, i32
  }
  func.func @transform_2(%arg0: i32) -> (i32, i32, i32) {
    %c0_i32 = arith.constant 0 : i32
    %c0_i32_0 = arith.constant 0 : i32
    %c0_i32_1 = arith.constant 0 : i32
    return %arg0, %c0_i32, %c0_i32_0 : i32, i32, i32
  }
}

</mosaic_0001>

<llo_original>
// kernel: model_forward.1
$region0: #{model_forward.1}
  #allocation0 [shape = 'u32[]', space=smem, size = 0x4, offset = 0x4, fixed_abs, tag = 'smem constant byte address 0x4 - core index']
  #allocation1 [shape = 'u32[144,128]{1,0:T(1,128)}', space=vmem, size = 0x12000, scoped, tag = 'internal scratch']
  %s0 = inlined_call_operand.vmem [shape: f32[8,28,384], index: 0, kind: input, shape index: {}]
  %s1 = inlined_call_operand.vmem [shape: f32[135,28], index: 1, kind: input, shape index: {}]
  %s2 = inlined_call_operand.vmem [shape: f32[8,135,384], index: 2, kind: output, shape index: {}]
  %s3 = sld [smem:[#allocation0]]
  $region41: #{model_forward.1} parent=0
    _
  %s5 = ssub.s32 1, %s3
  %s6 = scalar_select 0, %s5, %s3
  loop: start=0, step=1, limit=4
  $region2: #{model_forward.1} parent=0 // loop_pre_header
    _
  $region3: #{model_forward.1} parent=0 // loop_header
    %s8 = sphi 0, %s12
    %p9 = scmp.ge.s32.totalorder %s8, 4
    %s18 = sphi 0, %s20
    %s21 = sphi 0, %s18
    %s22 = sphi 0, %s21
    %s38 = sphi 0, %s22
    %s42 = sphi 0, %s42
    %s44 = sphi 0, %s42
    %s45 = sphi 0, %s44
    %s59 = sphi 0, %s45
    %s65 = sphi 0, %s67
    %s68 = sphi 0, %s65
    %s69 = sphi 0, %s68
    %s85 = sphi 0, %s69
  $region4: #{model_forward.1} parent=0 // loop_header_branch
    %11 = sbr.rel (%p9) target = $region8
  $region5: #{model_forward.1} parent=0 // loop_body
    %s13 = ssub.s32 %s8, 1
    %s14 = ssub.s32 %s8, 2
    %s15 = sadd.s32 %s8, 1
    %s16 = ssub.s32 %s8, %s15
    %p17 = scmp.eq.s32.totalorder %s16, 0
    %s19 = sadd.s32 %s18, 1
    %s20 = scalar_select %p17, %s18, %s19
    %p23 = pneg %p17
    %p24 = scmp.eq.s32.totalorder %s8, 1
    %p25 = por %p23, %p24
    %p26 = scmp.ne.s32.totalorder %s18, %s21
    %p27 = scmp.eq.s32.totalorder %s8, 0
    %p28 = por %p26, %p27
    %p29 = scmp.ne.s32.totalorder %s18, %s21
    %p30 = scmp.eq.s32.totalorder %s13, 1
    %p31 = por %p29, %p30
    %p32 = scmp.ne.s32.totalorder %s21, %s22
    %p33 = scmp.eq.s32.totalorder %s13, 0
    %p34 = por %p32, %p33
    %p35 = scmp.ne.s32.totalorder %s21, %s22
    %p36 = scmp.eq.s32.totalorder %s14, 1
    %p37 = por %p35, %p36
    %p39 = scmp.ne.s32.totalorder %s22, %s38
    %p40 = scmp.eq.s32.totalorder %s14, 0
    %p41 = por %p39, %p40
    %s43 = sadd.s32 %s42, 1
    %p46 = scmp.eq.s32.totalorder %s8, 1
    %p47 = scmp.ne.s32.totalorder %s42, %s44
    %p48 = scmp.eq.s32.totalorder %s8, 0
    %p49 = por %p47, %p48
    %p50 = scmp.ne.s32.totalorder %s42, %s44
    %p51 = scmp.eq.s32.totalorder %s13, 1
    %p52 = por %p50, %p51
    %p53 = scmp.ne.s32.totalorder %s44, %s45
    %p54 = scmp.eq.s32.totalorder %s13, 0
    %p55 = por %p53, %p54
    %p56 = scmp.ne.s32.totalorder %s44, %s45
    %p57 = scmp.eq.s32.totalorder %s14, 1
    %p58 = por %p56, %p57
    %p60 = scmp.ne.s32.totalorder %s45, %s59
    %p61 = scmp.eq.s32.totalorder %s14, 0
    %p62 = por %p60, %p61
    %s63 = ssub.s32 %s8, %s15
    %p64 = scmp.eq.s32.totalorder %s63, 0
    %s66 = sadd.s32 %s65, 1
    %s67 = scalar_select %p64, %s65, %s66
    %p70 = pneg %p64
    %p71 = scmp.eq.s32.totalorder %s8, 1
    %p72 = por %p70, %p71
    %p73 = scmp.ne.s32.totalorder %s65, %s68
    %p74 = scmp.eq.s32.totalorder %s8, 0
    %p75 = por %p73, %p74
    %p76 = scmp.ne.s32.totalorder %s65, %s68
    %p77 = scmp.eq.s32.totalorder %s13, 1
    %p78 = por %p76, %p77
    %p79 = scmp.ne.s32.totalorder %s68, %s69
    %p80 = scmp.eq.s32.totalorder %s13, 0
    %p81 = por %p79, %p80
    %p82 = scmp.ne.s32.totalorder %s68, %s69
    %p83 = scmp.eq.s32.totalorder %s14, 1
    %p84 = por %p82, %p83
    %p86 = scmp.ne.s32.totalorder %s69, %s85
    %p87 = scmp.eq.s32.totalorder %s14, 0
    %p88 = por %p86, %p87
    %p89 = scmp.le.s32.totalorder 1, %s8
    %p90 = scmp.lt.s32.totalorder %s8, 3
    %p91 = pnand %p89, %p90
    %p92 = pneg %p91
    // Predicated region
    $region9: #{model_forward.1} parent=5 // pred_check
      _
    $region10: #{model_forward.1} parent=5 // pred_check_branch
      %94 = sbr.rel (%p91) target = $region12
    $region11: #{model_forward.1} parent=5 // pred_region
      %s95 = ssub.s32 %s8, 1
      // Predicated region
      $region13: #{model_forward.1} parent=11 // pred_check
        %p96 = pneg %p55
      $region14: #{model_forward.1} parent=11 // pred_check_branch
        %98 = sbr.rel (%p96) target = $region16
      $region15: #{model_forward.1} parent=11 // pred_region
        _
      $region16: #{model_forward.1} parent=11 // pred_fallthru
        _
    $region12: #{model_forward.1} parent=5 // pred_fallthru
      _
    %p99 = scmp.lt.s32.totalorder %s8, 2
    // Predicated region
    $region17: #{model_forward.1} parent=5 // pred_check
      %p100 = pneg %p99
    $region18: #{model_forward.1} parent=5 // pred_check_branch
      %102 = sbr.rel (%p100) target = $region20
    $region19: #{model_forward.1} parent=5 // pred_region
      // Predicated region
      $region21: #{model_forward.1} parent=19 // pred_check
        %p103 = pneg %p28
      $region22: #{model_forward.1} parent=19 // pred_check_branch
        %105 = sbr.rel (%p103) target = $region24
      $region23: #{model_forward.1} parent=19 // pred_region
        %s106 = smul.u32 4, %s8
        %p107 = scmp.lt.s32.totalorder %s106, 7
        %s108 = scalar_select %p107, %s106, 7
        %s109 = smul.addr %s108, 12
        %s110 = smul.addr %s109, 8
        %s111 = scalar_lea.vmem %s0, %s110
        %s112 = smul.u32 4, %s8
      $region24: #{model_forward.1} parent=19 // pred_fallthru
        _
    $region20: #{model_forward.1} parent=5 // pred_fallthru
      _
    %p113 = scmp.le.s32.totalorder 1, %s8
    %p114 = scmp.lt.s32.totalorder %s8, 3
    %p115 = pnand %p113, %p114
    %p116 = pneg %p115
    // Predicated region
    $region25: #{model_forward.1} parent=5 // pred_check
      _
    $region26: #{model_forward.1} parent=5 // pred_check_branch
      %118 = sbr.rel (%p115) target = $region28
    $region27: #{model_forward.1} parent=5 // pred_region
      %s119 = ssub.s32 %s8, 1
      %s120 = smul.u32 4, %s13
      %p121 = scmp.lt.s32.totalorder %s120, 7
      %s122 = scalar_select %p121, %s120, 7
      %s123 = smul.addr %s122, 12
      %s124 = smul.addr %s123, 8
      %s125 = scalar_lea.vmem %s0, %s124
      %p126 = pneg %p34
      %p127 = pneg %p31
      %p128 = pneg %p55
      %p129 = pneg %p52
      %p130 = pneg %p81
      %p131 = pneg %p78
      %s132 = smul.u32 4, %s13
      %p133 = scmp.lt.s32.totalorder %s132, 7
      %s134 = scalar_select %p133, %s132, 7
      %s135 = smul.addr %s134, 51
      %s136 = smul.addr %s135, 8
      %s137 = scalar_lea.vmem %s2, %s136
      %s138 = smul.u32 4, %s13
      %p139 = scmp.lt.s32.totalorder %s138, 7
      %s140 = scalar_select %p139, %s138, 7
      %s141 = smul.addr %s140, 12
      %s142 = smul.addr %s141, 8
      %s143 = scalar_lea.vmem %s0, %s142
      %s144 = smul.u32 4, %s13
      %s145 = smul.u32 4, %s13
      %p146 = scmp.lt.s32.totalorder %s145, 7
      %s147 = scalar_select %p146, %s145, 7
      %s148 = smul.addr %s147, 51
      %s149 = smul.addr %s148, 8
      %s150 = scalar_lea.vmem %s2, %s149
      %s151 = smul.u32 4, %s13
      %v152 = vld [vmem:[%s1] sm:$0xff]
      %v153 = vld [vmem:[%s1 + $0x8] sm:$0xff]
      %v154 = vld [vmem:[%s1 + $0x10] sm:$0xff]
      %v155 = vld [vmem:[%s1 + $0x18] sm:$0xff]
      %v156 = vld [vmem:[%s1 + $0x20] sm:$0xff]
      %v157 = vld [vmem:[%s1 + $0x28] sm:$0xff]
      %v158 = vld [vmem:[%s1 + $0x30] sm:$0xff]
      %v159 = vld [vmem:[%s1 + $0x38] sm:$0xff]
      %v160 = vld [vmem:[%s1 + $0x40] sm:$0xff]
      %v161 = vld [vmem:[%s1 + $0x48] sm:$0xff]
      %v162 = vld [vmem:[%s1 + $0x50] sm:$0xff]
      %v163 = vld [vmem:[%s1 + $0x58] sm:$0xff]
      %v164 = vld [vmem:[%s1 + $0x60] sm:$0xff]
      %v165 = vld [vmem:[%s1 + $0x68] sm:$0xff]
      %v166 = vld [vmem:[%s1 + $0x70] sm:$0xff]
      %v167 = vld [vmem:[%s1 + $0x78] sm:$0xff]
      %v168 = vld [vmem:[%s1 + $0x80] sm:$0x7f]
      %v169 = vld [vmem:[%s143] sm:$0xff]
      %v170 = vld [vmem:[%s143 + $0x8] sm:$0xff]
      %v171 = vld [vmem:[%s143 + $0x10] sm:$0xff]
      %v172 = vld [vmem:[%s143 + $0x18] sm:$0xff]
      %v173 = vld [vmem:[%s143 + $0x20] sm:$0xff]
      %v174 = vld [vmem:[%s143 + $0x28] sm:$0xff]
      %v175 = vld [vmem:[%s143 + $0x30] sm:$0xff]
      %v176 = vld [vmem:[%s143 + $0x38] sm:$0xff]
      %v177 = vld [vmem:[%s143 + $0x40] sm:$0xff]
      %v178 = vld [vmem:[%s143 + $0x48] sm:$0xf]
      %v179 = vld [vmem:[%s143 + $0x50] sm:$0xf]
      %v180 = vld [vmem:[%s143 + $0x58] sm:$0xf]
      %vm181 = vcmask 228352
      %v183 = vsel %vm181, %v152, 0
      %v186 = vsel %vm181, %v153, 0
      %v189 = vsel %vm181, %v154, 0
      %v192 = vsel %vm181, %v155, 0
      %v195 = vsel %vm181, %v156, 0
      %v198 = vsel %vm181, %v157, 0
      %v201 = vsel %vm181, %v158, 0
      %v204 = vsel %vm181, %v159, 0
      %v207 = vsel %vm181, %v160, 0
      %v210 = vsel %vm181, %v161, 0
      %v213 = vsel %vm181, %v162, 0
      %v216 = vsel %vm181, %v163, 0
      %v219 = vsel %vm181, %v164, 0
      %v222 = vsel %vm181, %v165, 0
      %v225 = vsel %vm181, %v166, 0
      %v228 = vsel %vm181, %v167, 0
      %v231 = vsel %vm181, %v168, 0
      %vm233 = vcmask 1043456
      %v235 = vsel %vm233, %v178, 0
      %v238 = vsel %vm233, %v179, 0
      %v241 = vsel %vm233, %v180, 0
      %243 = vmatprep.subr.mxu0 0.0
      %244 = vmatpush1.msra.mxu0 0.0
      %245 = vmatprep.subr.mxu0 0.0
      %246 = vmatpush1.msra.mxu0 0.0
      %247 = vmatprep.subr.mxu0 0.0
      %248 = vmatpush1.msra.mxu0 0.0
      %249 = vmatprep.subr.mxu0 0.0
      %250 = vmatpush1.msra.mxu0 0.0
      %251 = vmatprep.subr.mxu0 0.0
      %252 = vmatpush1.msra.mxu0 0.0
      %253 = vmatprep.subr.mxu0 0.0
      %254 = vmatpush1.msra.mxu0 0.0
      %255 = vmatprep.subr.mxu0 0.0
      %256 = vmatpush1.msra.mxu0 0.0
      %257 = vmatprep.subr.mxu0 0.0
      %258 = vmatpush1.msra.mxu0 0.0
      %259 = vmatprep.subr.mxu0 0.0
      %260 = vmatpush1.msra.mxu0 0.0
      %261 = vmatprep.subr.mxu0 0.0
      %262 = vmatpush1.msra.mxu0 0.0
      %263 = vmatprep.subr.mxu0 0.0
      %264 = vmatpush1.msra.mxu0 0.0
      %265 = vmatprep.subr.mxu0 0.0
      %266 = vmatpush1.msra.mxu0 0.0
      %267 = vmatprep.subr.mxu0 %v238
      %268 = vmatpush1.msra.mxu0 %v235
      %269 = vmatprep.subr.mxu0 %v176
      %270 = vmatpush1.msra.mxu0 %v175
      %271 = vmatprep.subr.mxu0 %v173
      %272 = vmatpush1.msra.mxu0 %v172
      %273 = vmatprep.subr.mxu0 %v170
      %274 = vmatpush1.msra.mxu0 %v169
      %275 = vmatprep.subr.mxu0 0.0
      %276 = vmatpush2.msra.mxu0 0.0
      %277 = vmatprep.subr.mxu0 0.0
      %278 = vmatpush2.msra.mxu0 0.0
      %279 = vmatprep.subr.mxu0 0.0
      %280 = vmatpush2.msra.mxu0 0.0
      %281 = vmatprep.subr.mxu0 0.0
      %282 = vmatpush2.msra.mxu0 0.0
      %283 = vmatprep.subr.mxu0 0.0
      %284 = vmatpush2.msra.mxu0 0.0
      %285 = vmatprep.subr.mxu0 0.0
      %286 = vmatpush2.msra.mxu0 0.0
      %287 = vmatprep.subr.mxu0 0.0
      %288 = vmatpush2.msra.mxu0 0.0
      %289 = vmatprep.subr.mxu0 0.0
      %290 = vmatpush2.msra.mxu0 0.0
      %291 = vmatprep.subr.mxu0 0.0
      %292 = vmatpush2.msra.mxu0 0.0
      %293 = vmatprep.subr.mxu0 0.0
      %294 = vmatpush2.msra.mxu0 0.0
      %295 = vmatprep.subr.mxu0 0.0
      %296 = vmatpush2.msra.mxu0 0.0
      %297 = vmatprep.subr.mxu0 0.0
      %298 = vmatpush2.msra.mxu0 0.0
      %299 = vmatprep.subr.mxu0 0.0
      %300 = vmatpush2.msra.mxu0 0.0
      %301 = vmatprep.subr.mxu0 0.0
      %302 = vmatpush2.msra.mxu0 0.0
      %303 = vmatprep.subr.mxu0 0.0
      %304 = vmatpush2.msra.mxu0 0.0
      %305 = vmatprep.subr.mxu0 0.0
      %306 = vmatpush2.msra.mxu0 0.0
      %307 = vmatprep.mubr.f32.mxu0 0.0
      %308 = vmatmul.mubr.f32.gmra.mxu0 %v183
      %v309 = vpop.f32.mrf.mxu0
      %v310 = vadd.f32 0.0, %v309
      %v311 = vpop.f32.mrf.mxu0
      %v312 = vadd.f32 0.0, %v311
      %313 = vmatprep.mubr.f32.mxu0 0.0
      %314 = vmatmul.mubr.f32.gmra.mxu0 %v186
      %v315 = vpop.f32.mrf.mxu0
      %v316 = vadd.f32 0.0, %v315
      %v317 = vpop.f32.mrf.mxu0
      %v318 = vadd.f32 0.0, %v317
      %319 = vmatprep.mubr.f32.mxu0 0.0
      %320 = vmatmul.mubr.f32.gmra.mxu0 %v189
      %v321 = vpop.f32.mrf.mxu0
      %v322 = vadd.f32 0.0, %v321
      %v323 = vpop.f32.mrf.mxu0
      %v324 = vadd.f32 0.0, %v323
      %325 = vmatprep.mubr.f32.mxu0 0.0
      %326 = vmatmul.mubr.f32.gmra.mxu0 %v192
      %v327 = vpop.f32.mrf.mxu0
      %v328 = vadd.f32 0.0, %v327
      %v329 = vpop.f32.mrf.mxu0
      %v330 = vadd.f32 0.0, %v329
      %331 = vmatprep.mubr.f32.mxu0 0.0
      %332 = vmatmul.mubr.f32.gmra.mxu0 %v195
      %v333 = vpop.f32.mrf.mxu0
      %v334 = vadd.f32 0.0, %v333
      %v335 = vpop.f32.mrf.mxu0
      %v336 = vadd.f32 0.0, %v335
      %337 = vmatprep.mubr.f32.mxu0 0.0
      %338 = vmatmul.mubr.f32.gmra.mxu0 %v198
      %v339 = vpop.f32.mrf.mxu0
      %v340 = vadd.f32 0.0, %v339
      %v341 = vpop.f32.mrf.mxu0
      %v342 = vadd.f32 0.0, %v341
      %343 = vmatprep.mubr.f32.mxu0 0.0
      %344 = vmatmul.mubr.f32.gmra.mxu0 %v201
      %v345 = vpop.f32.mrf.mxu0
      %v346 = vadd.f32 0.0, %v345
      %v347 = vpop.f32.mrf.mxu0
      %v348 = vadd.f32 0.0, %v347
      %349 = vmatprep.mubr.f32.mxu0 0.0
      %350 = vmatmul.mubr.f32.gmra.mxu0 %v204
      %v351 = vpop.f32.mrf.mxu0
      %v352 = vadd.f32 0.0, %v351
      %v353 = vpop.f32.mrf.mxu0
      %v354 = vadd.f32 0.0, %v353
      %355 = vmatprep.mubr.f32.mxu0 0.0
      %356 = vmatmul.mubr.f32.gmra.mxu0 %v207
      %v357 = vpop.f32.mrf.mxu0
      %v358 = vadd.f32 0.0, %v357
      %v359 = vpop.f32.mrf.mxu0
      %v360 = vadd.f32 0.0, %v359
      %361 = vmatprep.mubr.f32.mxu0 0.0
      %362 = vmatmul.mubr.f32.gmra.mxu0 %v210
      %v363 = vpop.f32.mrf.mxu0
      %v364 = vadd.f32 0.0, %v363
      %v365 = vpop.f32.mrf.mxu0
      %v366 = vadd.f32 0.0, %v365
      %367 = vmatprep.mubr.f32.mxu0 0.0
      %368 = vmatmul.mubr.f32.gmra.mxu0 %v213
      %v369 = vpop.f32.mrf.mxu0
      %v370 = vadd.f32 0.0, %v369
      %v371 = vpop.f32.mrf.mxu0
      %v372 = vadd.f32 0.0, %v371
      %373 = vmatprep.mubr.f32.mxu0 0.0
      %374 = vmatmul.mubr.f32.gmra.mxu0 %v216
      %v375 = vpop.f32.mrf.mxu0
      %v376 = vadd.f32 0.0, %v375
      %v377 = vpop.f32.mrf.mxu0
      %v378 = vadd.f32 0.0, %v377
      %379 = vmatprep.mubr.f32.mxu0 0.0
      %380 = vmatmul.mubr.f32.gmra.mxu0 %v219
      %v381 = vpop.f32.mrf.mxu0
      %v382 = vadd.f32 0.0, %v381
      %v383 = vpop.f32.mrf.mxu0
      %v384 = vadd.f32 0.0, %v383
      %385 = vmatprep.mubr.f32.mxu0 0.0
      %386 = vmatmul.mubr.f32.gmra.mxu0 %v222
      %v387 = vpop.f32.mrf.mxu0
      %v388 = vadd.f32 0.0, %v387
      %v389 = vpop.f32.mrf.mxu0
      %v390 = vadd.f32 0.0, %v389
      %391 = vmatprep.mubr.f32.mxu0 0.0
      %392 = vmatmul.mubr.f32.gmra.mxu0 %v225
      %v393 = vpop.f32.mrf.mxu0
      %v394 = vadd.f32 0.0, %v393
      %v395 = vpop.f32.mrf.mxu0
      %v396 = vadd.f32 0.0, %v395
      %397 = vmatprep.mubr.f32.mxu0 0.0
      %398 = vmatmul.mubr.f32.gmra.mxu0 %v228
      %v399 = vpop.f32.mrf.mxu0
      %v400 = vadd.f32 0.0, %v399
      %v401 = vpop.f32.mrf.mxu0
      %v402 = vadd.f32 0.0, %v401
      %403 = vmatprep.mubr.f32.mxu0 0.0
      %404 = vmatmul.mubr.f32.gmra.mxu0 %v231
      %v405 = vpop.f32.mrf.mxu0
      %v406 = vadd.f32 0.0, %v405
      %v407 = vpop.f32.mrf.mxu0
      %v408 = vadd.f32 0.0, %v407
      %409 = vdwg.mxu0
      %410 = vmatprep.subr.mxu0 0.0
      %411 = vmatpush1.msra.mxu0 0.0
      %412 = vmatprep.subr.mxu0 0.0
      %413 = vmatpush1.msra.mxu0 0.0
      %414 = vmatprep.subr.mxu0 0.0
      %415 = vmatpush1.msra.mxu0 0.0
      %416 = vmatprep.subr.mxu0 0.0
      %417 = vmatpush1.msra.mxu0 0.0
      %418 = vmatprep.subr.mxu0 0.0
      %419 = vmatpush1.msra.mxu0 0.0
      %420 = vmatprep.subr.mxu0 0.0
      %421 = vmatpush1.msra.mxu0 0.0
      %422 = vmatprep.subr.mxu0 0.0
      %423 = vmatpush1.msra.mxu0 0.0
      %424 = vmatprep.subr.mxu0 0.0
      %425 = vmatpush1.msra.mxu0 0.0
      %426 = vmatprep.subr.mxu0 0.0
      %427 = vmatpush1.msra.mxu0 0.0
      %428 = vmatprep.subr.mxu0 0.0
      %429 = vmatpush1.msra.mxu0 0.0
      %430 = vmatprep.subr.mxu0 0.0
      %431 = vmatpush1.msra.mxu0 0.0
      %432 = vmatprep.subr.mxu0 0.0
      %433 = vmatpush1.msra.mxu0 0.0
      %434 = vmatprep.subr.mxu0 0.0
      %435 = vmatpush1.msra.mxu0 %v241
      %436 = vmatprep.subr.mxu0 0.0
      %437 = vmatpush1.msra.mxu0 %v177
      %438 = vmatprep.subr.mxu0 0.0
      %439 = vmatpush1.msra.mxu0 %v174
      %440 = vmatprep.subr.mxu0 0.0
      %441 = vmatpush1.msra.mxu0 %v171
      %442 = vmatprep.subr.mxu0 0.0
      %443 = vmatpush2.msra.mxu0 0.0
      %444 = vmatprep.subr.mxu0 0.0
      %445 = vmatpush2.msra.mxu0 0.0
      %446 = vmatprep.subr.mxu0 0.0
      %447 = vmatpush2.msra.mxu0 0.0
      %448 = vmatprep.subr.mxu0 0.0
      %449 = vmatpush2.msra.mxu0 0.0
      %450 = vmatprep.subr.mxu0 0.0
      %451 = vmatpush2.msra.mxu0 0.0
      %452 = vmatprep.subr.mxu0 0.0
      %453 = vmatpush2.msra.mxu0 0.0
      %454 = vmatprep.subr.mxu0 0.0
      %455 = vmatpush2.msra.mxu0 0.0
      %456 = vmatprep.subr.mxu0 0.0
      %457 = vmatpush2.msra.mxu0 0.0
      %458 = vmatprep.subr.mxu0 0.0
      %459 = vmatpush2.msra.mxu0 0.0
      %460 = vmatprep.subr.mxu0 0.0
      %461 = vmatpush2.msra.mxu0 0.0
      %462 = vmatprep.subr.mxu0 0.0
      %463 = vmatpush2.msra.mxu0 0.0
      %464 = vmatprep.subr.mxu0 0.0
      %465 = vmatpush2.msra.mxu0 0.0
      %466 = vmatprep.subr.mxu0 0.0
      %467 = vmatpush2.msra.mxu0 0.0
      %468 = vmatprep.subr.mxu0 0.0
      %469 = vmatpush2.msra.mxu0 0.0
      %470 = vmatprep.subr.mxu0 0.0
      %471 = vmatpush2.msra.mxu0 0.0
      %472 = vmatprep.subr.mxu0 0.0
      %473 = vmatpush2.msra.mxu0 0.0
      %474 = vmatprep.mubr.f32.mxu0 0.0
      %475 = vmatmul.mubr.f32.gmra.mxu0 %v183
      %v476 = vpop.f32.mrf.mxu0
      %v477 = vadd.f32 0.0, %v476
      %v478 = vpop.f32.mrf.mxu0
      %479 = vmatprep.mubr.f32.mxu0 0.0
      %480 = vmatmul.mubr.f32.gmra.mxu0 %v186
      %v481 = vpop.f32.mrf.mxu0
      %v482 = vadd.f32 0.0, %v481
      %v483 = vpop.f32.mrf.mxu0
      %484 = vmatprep.mubr.f32.mxu0 0.0
      %485 = vmatmul.mubr.f32.gmra.mxu0 %v189
      %v486 = vpop.f32.mrf.mxu0
      %v487 = vadd.f32 0.0, %v486
      %v488 = vpop.f32.mrf.mxu0
      %489 = vmatprep.mubr.f32.mxu0 0.0
      %490 = vmatmul.mubr.f32.gmra.mxu0 %v192
      %v491 = vpop.f32.mrf.mxu0
      %v492 = vadd.f32 0.0, %v491
      %v493 = vpop.f32.mrf.mxu0
      %494 = vmatprep.mubr.f32.mxu0 0.0
      %495 = vmatmul.mubr.f32.gmra.mxu0 %v195
      %v496 = vpop.f32.mrf.mxu0
      %v497 = vadd.f32 0.0, %v496
      %v498 = vpop.f32.mrf.mxu0
      %499 = vmatprep.mubr.f32.mxu0 0.0
      %500 = vmatmul.mubr.f32.gmra.mxu0 %v198
      %v501 = vpop.f32.mrf.mxu0
      %v502 = vadd.f32 0.0, %v501
      %v503 = vpop.f32.mrf.mxu0
      %504 = vmatprep.mubr.f32.mxu0 0.0
      %505 = vmatmul.mubr.f32.gmra.mxu0 %v201
      %v506 = vpop.f32.mrf.mxu0
      %v507 = vadd.f32 0.0, %v506
      %v508 = vpop.f32.mrf.mxu0
      %509 = vmatprep.mubr.f32.mxu0 0.0
      %510 = vmatmul.mubr.f32.gmra.mxu0 %v204
      %v511 = vpop.f32.mrf.mxu0
      %v512 = vadd.f32 0.0, %v511
      %v513 = vpop.f32.mrf.mxu0
      %514 = vmatprep.mubr.f32.mxu0 0.0
      %515 = vmatmul.mubr.f32.gmra.mxu0 %v207
      %v516 = vpop.f32.mrf.mxu0
      %v517 = vadd.f32 0.0, %v516
      %v518 = vpop.f32.mrf.mxu0
      %519 = vmatprep.mubr.f32.mxu0 0.0
      %520 = vmatmul.mubr.f32.gmra.mxu0 %v210
      %v521 = vpop.f32.mrf.mxu0
      %v522 = vadd.f32 0.0, %v521
      %v523 = vpop.f32.mrf.mxu0
      %524 = vmatprep.mubr.f32.mxu0 0.0
      %525 = vmatmul.mubr.f32.gmra.mxu0 %v213
      %v526 = vpop.f32.mrf.mxu0
      %v527 = vadd.f32 0.0, %v526
      %v528 = vpop.f32.mrf.mxu0
      %529 = vmatprep.mubr.f32.mxu0 0.0
      %530 = vmatmul.mubr.f32.gmra.mxu0 %v216
      %v531 = vpop.f32.mrf.mxu0
      %v532 = vadd.f32 0.0, %v531
      %v533 = vpop.f32.mrf.mxu0
      %534 = vmatprep.mubr.f32.mxu0 0.0
      %535 = vmatmul.mubr.f32.gmra.mxu0 %v219
      %v536 = vpop.f32.mrf.mxu0
      %v537 = vadd.f32 0.0, %v536
      %v538 = vpop.f32.mrf.mxu0
      %539 = vmatprep.mubr.f32.mxu0 0.0
      %540 = vmatmul.mubr.f32.gmra.mxu0 %v222
      %v541 = vpop.f32.mrf.mxu0
      %v542 = vadd.f32 0.0, %v541
      %v543 = vpop.f32.mrf.mxu0
      %544 = vmatprep.mubr.f32.mxu0 0.0
      %545 = vmatmul.mubr.f32.gmra.mxu0 %v225
      %v546 = vpop.f32.mrf.mxu0
      %v547 = vadd.f32 0.0, %v546
      %v548 = vpop.f32.mrf.mxu0
      %549 = vmatprep.mubr.f32.mxu0 0.0
      %550 = vmatmul.mubr.f32.gmra.mxu0 %v228
      %v551 = vpop.f32.mrf.mxu0
      %v552 = vadd.f32 0.0, %v551
      %v553 = vpop.f32.mrf.mxu0
      %554 = vmatprep.mubr.f32.mxu0 0.0
      %555 = vmatmul.mubr.f32.gmra.mxu0 %v231
      %v556 = vpop.f32.mrf.mxu0
      %v557 = vadd.f32 0.0, %v556
      %v558 = vpop.f32.mrf.mxu0
      %559 = vdwg.mxu0
      %560 = vst [vmem:[%s150] sm:$0xff] %v310
      %561 = vst [vmem:[%s150 + $0x8] sm:$0xff] %v312
      %562 = vst [vmem:[%s150 + $0x10] sm:$0xff] %v477
      %563 = vst [vmem:[%s150 + $0x18] sm:$0xff] %v316
      %564 = vst [vmem:[%s150 + $0x20] sm:$0xff] %v318
      %565 = vst [vmem:[%s150 + $0x28] sm:$0xff] %v482
      %566 = vst [vmem:[%s150 + $0x30] sm:$0xff] %v322
      %567 = vst [vmem:[%s150 + $0x38] sm:$0xff] %v324
      %568 = vst [vmem:[%s150 + $0x40] sm:$0xff] %v487
      %569 = vst [vmem:[%s150 + $0x48] sm:$0xff] %v328
      %570 = vst [vmem:[%s150 + $0x50] sm:$0xff] %v330
      %571 = vst [vmem:[%s150 + $0x58] sm:$0xff] %v492
      %572 = vst [vmem:[%s150 + $0x60] sm:$0xff] %v334
      %573 = vst [vmem:[%s150 + $0x68] sm:$0xff] %v336
      %574 = vst [vmem:[%s150 + $0x70] sm:$0xff] %v497
      %575 = vst [vmem:[%s150 + $0x78] sm:$0xff] %v340
      %576 = vst [vmem:[%s150 + $0x80] sm:$0xff] %v342
      %577 = vst [vmem:[%s150 + $0x88] sm:$0xff] %v502
      %578 = vst [vmem:[%s150 + $0x90] sm:$0xff] %v346
      %579 = vst [vmem:[%s150 + $0x98] sm:$0xff] %v348
      %580 = vst [vmem:[%s150 + $0xa0] sm:$0xff] %v507
      %581 = vst [vmem:[%s150 + $0xa8] sm:$0xff] %v352
      %582 = vst [vmem:[%s150 + $0xb0] sm:$0xff] %v354
      %583 = vst [vmem:[%s150 + $0xb8] sm:$0xff] %v512
      %584 = vst [vmem:[%s150 + $0xc0] sm:$0xff] %v358
      %585 = vst [vmem:[%s150 + $0xc8] sm:$0xff] %v360
      %586 = vst [vmem:[%s150 + $0xd0] sm:$0xff] %v517
      %587 = vst [vmem:[%s150 + $0xd8] sm:$0xff] %v364
      %588 = vst [vmem:[%s150 + $0xe0] sm:$0xff] %v366
      %589 = vst [vmem:[%s150 + $0xe8] sm:$0xff] %v522
      %590 = vst [vmem:[%s150 + $0xf0] sm:$0xff] %v370
      %591 = vst [vmem:[%s150 + $0xf8] sm:$0xff] %v372
      %592 = vst [vmem:[%s150 + $0x100] sm:$0xff] %v527
      %593 = vst [vmem:[%s150 + $0x108] sm:$0xff] %v376
      %594 = vst [vmem:[%s150 + $0x110] sm:$0xff] %v378
      %595 = vst [vmem:[%s150 + $0x118] sm:$0xff] %v532
      %596 = vst [vmem:[%s150 + $0x120] sm:$0xff] %v382
      %597 = vst [vmem:[%s150 + $0x128] sm:$0xff] %v384
      %598 = vst [vmem:[%s150 + $0x130] sm:$0xff] %v537
      %599 = vst [vmem:[%s150 + $0x138] sm:$0xff] %v388
      %600 = vst [vmem:[%s150 + $0x140] sm:$0xff] %v390
      %601 = vst [vmem:[%s150 + $0x148] sm:$0xff] %v542
      %602 = vst [vmem:[%s150 + $0x150] sm:$0xff] %v394
      %603 = vst [vmem:[%s150 + $0x158] sm:$0xff] %v396
      %604 = vst [vmem:[%s150 + $0x160] sm:$0xff] %v547
      %605 = vst [vmem:[%s150 + $0x168] sm:$0xff] %v400
      %606 = vst [vmem:[%s150 + $0x170] sm:$0xff] %v402
      %607 = vst [vmem:[%s150 + $0x178] sm:$0xff] %v552
      %608 = vst [vmem:[%s150 + $0x180] sm:$0x7f] %v406
      %609 = vst [vmem:[%s150 + $0x188] sm:$0x7f] %v408
      %610 = vst [vmem:[%s150 + $0x190] sm:$0x7f] %v557
      %v611 = vld [vmem:[%s1] sm:$0xff]
      %v612 = vld [vmem:[%s1 + $0x8] sm:$0xff]
      %v613 = vld [vmem:[%s1 + $0x10] sm:$0xff]
      %v614 = vld [vmem:[%s1 + $0x18] sm:$0xff]
      %v615 = vld [vmem:[%s1 + $0x20] sm:$0xff]
      %v616 = vld [vmem:[%s1 + $0x28] sm:$0xff]
      %v617 = vld [vmem:[%s1 + $0x30] sm:$0xff]
      %v618 = vld [vmem:[%s1 + $0x38] sm:$0xff]
      %v619 = vld [vmem:[%s1 + $0x40] sm:$0xff]
      %v620 = vld [vmem:[%s1 + $0x48] sm:$0xff]
      %v621 = vld [vmem:[%s1 + $0x50] sm:$0xff]
      %v622 = vld [vmem:[%s1 + $0x58] sm:$0xff]
      %v623 = vld [vmem:[%s1 + $0x60] sm:$0xff]
      %v624 = vld [vmem:[%s1 + $0x68] sm:$0xff]
      %v625 = vld [vmem:[%s1 + $0x70] sm:$0xff]
      %v626 = vld [vmem:[%s1 + $0x78] sm:$0xff]
      %v627 = vld [vmem:[%s1 + $0x80] sm:$0x7f]
      %s628 = scalar_lea.vmem %s143, 96
      %v629 = vld [vmem:[%s628] sm:$0xff]
      %v630 = vld [vmem:[%s628 + $0x8] sm:$0xff]
      %v631 = vld [vmem:[%s628 + $0x10] sm:$0xff]
      %v632 = vld [vmem:[%s628 + $0x18] sm:$0xff]
      %v633 = vld [vmem:[%s628 + $0x20] sm:$0xff]
      %v634 = vld [vmem:[%s628 + $0x28] sm:$0xff]
      %v635 = vld [vmem:[%s628 + $0x30] sm:$0xff]
      %v636 = vld [vmem:[%s628 + $0x38] sm:$0xff]
      %v637 = vld [vmem:[%s628 + $0x40] sm:$0xff]
      %v638 = vld [vmem:[%s628 + $0x48] sm:$0xf]
      %v639 = vld [vmem:[%s628 + $0x50] sm:$0xf]
      %v640 = vld [vmem:[%s628 + $0x58] sm:$0xf]
      %v642 = vsel %vm181, %v611, 0
      %v645 = vsel %vm181, %v612, 0
      %v648 = vsel %vm181, %v613, 0
      %v651 = vsel %vm181, %v614, 0
      %v654 = vsel %vm181, %v615, 0
      %v657 = vsel %vm181, %v616, 0
      %v660 = vsel %vm181, %v617, 0
      %v663 = vsel %vm181, %v618, 0
      %v666 = vsel %vm181, %v619, 0
      %v669 = vsel %vm181, %v620, 0
      %v672 = vsel %vm181, %v621, 0
      %v675 = vsel %vm181, %v622, 0
      %v678 = vsel %vm181, %v623, 0
      %v681 = vsel %vm181, %v624, 0
      %v684 = vsel %vm181, %v625, 0
      %v687 = vsel %vm181, %v626, 0
      %v690 = vsel %vm181, %v627, 0
      %v693 = vsel %vm233, %v638, 0
      %v696 = vsel %vm233, %v639, 0
      %v699 = vsel %vm233, %v640, 0
      %701 = vmatprep.subr.mxu0 0.0
      %702 = vmatpush1.msra.mxu0 0.0
      %703 = vmatprep.subr.mxu0 0.0
      %704 = vmatpush1.msra.mxu0 0.0
      %705 = vmatprep.subr.mxu0 0.0
      %706 = vmatpush1.msra.mxu0 0.0
      %707 = vmatprep.subr.mxu0 0.0
      %708 = vmatpush1.msra.mxu0 0.0
      %709 = vmatprep.subr.mxu0 0.0
      %710 = vmatpush1.msra.mxu0 0.0
      %711 = vmatprep.subr.mxu0 0.0
      %712 = vmatpush1.msra.mxu0 0.0
      %713 = vmatprep.subr.mxu0 0.0
      %714 = vmatpush1.msra.mxu0 0.0
      %715 = vmatprep.subr.mxu0 0.0
      %716 = vmatpush1.msra.mxu0 0.0
      %717 = vmatprep.subr.mxu0 0.0
      %718 = vmatpush1.msra.mxu0 0.0
      %719 = vmatprep.subr.mxu0 0.0
      %720 = vmatpush1.msra.mxu0 0.0
      %721 = vmatprep.subr.mxu0 0.0
      %722 = vmatpush1.msra.mxu0 0.0
      %723 = vmatprep.subr.mxu0 0.0
      %724 = vmatpush1.msra.mxu0 0.0
      %725 = vmatprep.subr.mxu0 %v696
      %726 = vmatpush1.msra.mxu0 %v693
      %727 = vmatprep.subr.mxu0 %v636
      %728 = vmatpush1.msra.mxu0 %v635
      %729 = vmatprep.subr.mxu0 %v633
      %730 = vmatpush1.msra.mxu0 %v632
      %731 = vmatprep.subr.mxu0 %v630
      %732 = vmatpush1.msra.mxu0 %v629
      %733 = vmatprep.subr.mxu0 0.0
      %734 = vmatpush2.msra.mxu0 0.0
      %735 = vmatprep.subr.mxu0 0.0
      %736 = vmatpush2.msra.mxu0 0.0
      %737 = vmatprep.subr.mxu0 0.0
      %738 = vmatpush2.msra.mxu0 0.0
      %739 = vmatprep.subr.mxu0 0.0
      %740 = vmatpush2.msra.mxu0 0.0
      %741 = vmatprep.subr.mxu0 0.0
      %742 = vmatpush2.msra.mxu0 0.0
      %743 = vmatprep.subr.mxu0 0.0
      %744 = vmatpush2.msra.mxu0 0.0
      %745 = vmatprep.subr.mxu0 0.0
      %746 = vmatpush2.msra.mxu0 0.0
      %747 = vmatprep.subr.mxu0 0.0
      %748 = vmatpush2.msra.mxu0 0.0
      %749 = vmatprep.subr.mxu0 0.0
      %750 = vmatpush2.msra.mxu0 0.0
      %751 = vmatprep.subr.mxu0 0.0
      %752 = vmatpush2.msra.mxu0 0.0
      %753 = vmatprep.subr.mxu0 0.0
      %754 = vmatpush2.msra.mxu0 0.0
      %755 = vmatprep.subr.mxu0 0.0
      %756 = vmatpush2.msra.mxu0 0.0
      %757 = vmatprep.subr.mxu0 0.0
      %758 = vmatpush2.msra.mxu0 0.0
      %759 = vmatprep.subr.mxu0 0.0
      %760 = vmatpush2.msra.mxu0 0.0
      %761 = vmatprep.subr.mxu0 0.0
      %762 = vmatpush2.msra.mxu0 0.0
      %763 = vmatprep.subr.mxu0 0.0
      %764 = vmatpush2.msra.mxu0 0.0
      %765 = vmatprep.mubr.f32.mxu0 0.0
      %766 = vmatmul.mubr.f32.gmra.mxu0 %v642
      %v767 = vpop.f32.mrf.mxu0
      %v768 = vadd.f32 0.0, %v767
      %v769 = vpop.f32.mrf.mxu0
      %v770 = vadd.f32 0.0, %v769
      %771 = vmatprep.mubr.f32.mxu0 0.0
      %772 = vmatmul.mubr.f32.gmra.mxu0 %v645
      %v773 = vpop.f32.mrf.mxu0
      %v774 = vadd.f32 0.0, %v773
      %v775 = vpop.f32.mrf.mxu0
      %v776 = vadd.f32 0.0, %v775
      %777 = vmatprep.mubr.f32.mxu0 0.0
      %778 = vmatmul.mubr.f32.gmra.mxu0 %v648
      %v779 = vpop.f32.mrf.mxu0
      %v780 = vadd.f32 0.0, %v779
      %v781 = vpop.f32.mrf.mxu0
      %v782 = vadd.f32 0.0, %v781
      %783 = vmatprep.mubr.f32.mxu0 0.0
      %784 = vmatmul.mubr.f32.gmra.mxu0 %v651
      %v785 = vpop.f32.mrf.mxu0
      %v786 = vadd.f32 0.0, %v785
      %v787 = vpop.f32.mrf.mxu0
      %v788 = vadd.f32 0.0, %v787
      %789 = vmatprep.mubr.f32.mxu0 0.0
      %790 = vmatmul.mubr.f32.gmra.mxu0 %v654
      %v791 = vpop.f32.mrf.mxu0
      %v792 = vadd.f32 0.0, %v791
      %v793 = vpop.f32.mrf.mxu0
      %v794 = vadd.f32 0.0, %v793
      %795 = vmatprep.mubr.f32.mxu0 0.0
      %796 = vmatmul.mubr.f32.gmra.mxu0 %v657
      %v797 = vpop.f32.mrf.mxu0
      %v798 = vadd.f32 0.0, %v797
      %v799 = vpop.f32.mrf.mxu0
      %v800 = vadd.f32 0.0, %v799
      %801 = vmatprep.mubr.f32.mxu0 0.0
      %802 = vmatmul.mubr.f32.gmra.mxu0 %v660
      %v803 = vpop.f32.mrf.mxu0
      %v804 = vadd.f32 0.0, %v803
      %v805 = vpop.f32.mrf.mxu0
      %v806 = vadd.f32 0.0, %v805
      %807 = vmatprep.mubr.f32.mxu0 0.0
      %808 = vmatmul.mubr.f32.gmra.mxu0 %v663
      %v809 = vpop.f32.mrf.mxu0
      %v810 = vadd.f32 0.0, %v809
      %v811 = vpop.f32.mrf.mxu0
      %v812 = vadd.f32 0.0, %v811
      %813 = vmatprep.mubr.f32.mxu0 0.0
      %814 = vmatmul.mubr.f32.gmra.mxu0 %v666
      %v815 = vpop.f32.mrf.mxu0
      %v816 = vadd.f32 0.0, %v815
      %v817 = vpop.f32.mrf.mxu0
      %v818 = vadd.f32 0.0, %v817
      %819 = vmatprep.mubr.f32.mxu0 0.0
      %820 = vmatmul.mubr.f32.gmra.mxu0 %v669
      %v821 = vpop.f32.mrf.mxu0
      %v822 = vadd.f32 0.0, %v821
      %v823 = vpop.f32.mrf.mxu0
      %v824 = vadd.f32 0.0, %v823
      %825 = vmatprep.mubr.f32.mxu0 0.0
      %826 = vmatmul.mubr.f32.gmra.mxu0 %v672
      %v827 = vpop.f32.mrf.mxu0
      %v828 = vadd.f32 0.0, %v827
      %v829 = vpop.f32.mrf.mxu0
      %v830 = vadd.f32 0.0, %v829
      %831 = vmatprep.mubr.f32.mxu0 0.0
      %832 = vmatmul.mubr.f32.gmra.mxu0 %v675
      %v833 = vpop.f32.mrf.mxu0
      %v834 = vadd.f32 0.0, %v833
      %v835 = vpop.f32.mrf.mxu0
      %v836 = vadd.f32 0.0, %v835
      %837 = vmatprep.mubr.f32.mxu0 0.0
      %838 = vmatmul.mubr.f32.gmra.mxu0 %v678
      %v839 = vpop.f32.mrf.mxu0
      %v840 = vadd.f32 0.0, %v839
      %v841 = vpop.f32.mrf.mxu0
      %v842 = vadd.f32 0.0, %v841
      %843 = vmatprep.mubr.f32.mxu0 0.0
      %844 = vmatmul.mubr.f32.gmra.mxu0 %v681
      %v845 = vpop.f32.mrf.mxu0
      %v846 = vadd.f32 0.0, %v845
      %v847 = vpop.f32.mrf.mxu0
      %v848 = vadd.f32 0.0, %v847
      %849 = vmatprep.mubr.f32.mxu0 0.0
      %850 = vmatmul.mubr.f32.gmra.mxu0 %v684
      %v851 = vpop.f32.mrf.mxu0
      %v852 = vadd.f32 0.0, %v851
      %v853 = vpop.f32.mrf.mxu0
      %v854 = vadd.f32 0.0, %v853
      %855 = vmatprep.mubr.f32.mxu0 0.0
      %856 = vmatmul.mubr.f32.gmra.mxu0 %v687
      %v857 = vpop.f32.mrf.mxu0
      %v858 = vadd.f32 0.0, %v857
      %v859 = vpop.f32.mrf.mxu0
      %v860 = vadd.f32 0.0, %v859
      %861 = vmatprep.mubr.f32.mxu0 0.0
      %862 = vmatmul.mubr.f32.gmra.mxu0 %v690
      %v863 = vpop.f32.mrf.mxu0
      %v864 = vadd.f32 0.0, %v863
      %v865 = vpop.f32.mrf.mxu0
      %v866 = vadd.f32 0.0, %v865
      %867 = vdwg.mxu0
      %868 = vmatprep.subr.mxu0 0.0
      %869 = vmatpush1.msra.mxu0 0.0
      %870 = vmatprep.subr.mxu0 0.0
      %871 = vmatpush1.msra.mxu0 0.0
      %872 = vmatprep.subr.mxu0 0.0
      %873 = vmatpush1.msra.mxu0 0.0
      %874 = vmatprep.subr.mxu0 0.0
      %875 = vmatpush1.msra.mxu0 0.0
      %876 = vmatprep.subr.mxu0 0.0
      %877 = vmatpush1.msra.mxu0 0.0
      %878 = vmatprep.subr.mxu0 0.0
      %879 = vmatpush1.msra.mxu0 0.0
      %880 = vmatprep.subr.mxu0 0.0
      %881 = vmatpush1.msra.mxu0 0.0
      %882 = vmatprep.subr.mxu0 0.0
      %883 = vmatpush1.msra.mxu0 0.0
      %884 = vmatprep.subr.mxu0 0.0
      %885 = vmatpush1.msra.mxu0 0.0
      %886 = vmatprep.subr.mxu0 0.0
      %887 = vmatpush1.msra.mxu0 0.0
      %888 = vmatprep.subr.mxu0 0.0
      %889 = vmatpush1.msra.mxu0 0.0
      %890 = vmatprep.subr.mxu0 0.0
      %891 = vmatpush1.msra.mxu0 0.0
      %892 = vmatprep.subr.mxu0 0.0
      %893 = vmatpush1.msra.mxu0 %v699
      %894 = vmatprep.subr.mxu0 0.0
      %895 = vmatpush1.msra.mxu0 %v637
      %896 = vmatprep.subr.mxu0 0.0
      %897 = vmatpush1.msra.mxu0 %v634
      %898 = vmatprep.subr.mxu0 0.0
      %899 = vmatpush1.msra.mxu0 %v631
      %900 = vmatprep.subr.mxu0 0.0
      %901 = vmatpush2.msra.mxu0 0.0
      %902 = vmatprep.subr.mxu0 0.0
      %903 = vmatpush2.msra.mxu0 0.0
      %904 = vmatprep.subr.mxu0 0.0
      %905 = vmatpush2.msra.mxu0 0.0
      %906 = vmatprep.subr.mxu0 0.0
      %907 = vmatpush2.msra.mxu0 0.0
      %908 = vmatprep.subr.mxu0 0.0
      %909 = vmatpush2.msra.mxu0 0.0
      %910 = vmatprep.subr.mxu0 0.0
      %911 = vmatpush2.msra.mxu0 0.0
      %912 = vmatprep.subr.mxu0 0.0
      %913 = vmatpush2.msra.mxu0 0.0
      %914 = vmatprep.subr.mxu0 0.0
      %915 = vmatpush2.msra.mxu0 0.0
      %916 = vmatprep.subr.mxu0 0.0
      %917 = vmatpush2.msra.mxu0 0.0
      %918 = vmatprep.subr.mxu0 0.0
      %919 = vmatpush2.msra.mxu0 0.0
      %920 = vmatprep.subr.mxu0 0.0
      %921 = vmatpush2.msra.mxu0 0.0
      %922 = vmatprep.subr.mxu0 0.0
      %923 = vmatpush2.msra.mxu0 0.0
      %924 = vmatprep.subr.mxu0 0.0
      %925 = vmatpush2.msra.mxu0 0.0
      %926 = vmatprep.subr.mxu0 0.0
      %927 = vmatpush2.msra.mxu0 0.0
      %928 = vmatprep.subr.mxu0 0.0
      %929 = vmatpush2.msra.mxu0 0.0
      %930 = vmatprep.subr.mxu0 0.0
      %931 = vmatpush2.msra.mxu0 0.0
      %932 = vmatprep.mubr.f32.mxu0 0.0
      %933 = vmatmul.mubr.f32.gmra.mxu0 %v642
      %v934 = vpop.f32.mrf.mxu0
      %v935 = vadd.f32 0.0, %v934
      %v936 = vpop.f32.mrf.mxu0
      %937 = vmatprep.mubr.f32.mxu0 0.0
      %938 = vmatmul.mubr.f32.gmra.mxu0 %v645
      %v939 = vpop.f32.mrf.mxu0
      %v940 = vadd.f32 0.0, %v939
      %v941 = vpop.f32.mrf.mxu0
      %942 = vmatprep.mubr.f32.mxu0 0.0
      %943 = vmatmul.mubr.f32.gmra.mxu0 %v648
      %v944 = vpop.f32.mrf.mxu0
      %v945 = vadd.f32 0.0, %v944
      %v946 = vpop.f32.mrf.mxu0
      %947 = vmatprep.mubr.f32.mxu0 0.0
      %948 = vmatmul.mubr.f32.gmra.mxu0 %v651
      %v949 = vpop.f32.mrf.mxu0
      %v950 = vadd.f32 0.0, %v949
      %v951 = vpop.f32.mrf.mxu0
      %952 = vmatprep.mubr.f32.mxu0 0.0
      %953 = vmatmul.mubr.f32.gmra.mxu0 %v654
      %v954 = vpop.f32.mrf.mxu0
      %v955 = vadd.f32 0.0, %v954
      %v956 = vpop.f32.mrf.mxu0
      %957 = vmatprep.mubr.f32.mxu0 0.0
      %958 = vmatmul.mubr.f32.gmra.mxu0 %v657
      %v959 = vpop.f32.mrf.mxu0
      %v960 = vadd.f32 0.0, %v959
      %v961 = vpop.f32.mrf.mxu0
      %962 = vmatprep.mubr.f32.mxu0 0.0
      %963 = vmatmul.mubr.f32.gmra.mxu0 %v660
      %v964 = vpop.f32.mrf.mxu0
      %v965 = vadd.f32 0.0, %v964
      %v966 = vpop.f32.mrf.mxu0
      %967 = vmatprep.mubr.f32.mxu0 0.0
      %968 = vmatmul.mubr.f32.gmra.mxu0 %v663
      %v969 = vpop.f32.mrf.mxu0
      %v970 = vadd.f32 0.0, %v969
      %v971 = vpop.f32.mrf.mxu0
      %972 = vmatprep.mubr.f32.mxu0 0.0
      %973 = vmatmul.mubr.f32.gmra.mxu0 %v666
      %v974 = vpop.f32.mrf.mxu0
      %v975 = vadd.f32 0.0, %v974
      %v976 = vpop.f32.mrf.mxu0
      %977 = vmatprep.mubr.f32.mxu0 0.0
      %978 = vmatmul.mubr.f32.gmra.mxu0 %v669
      %v979 = vpop.f32.mrf.mxu0
      %v980 = vadd.f32 0.0, %v979
      %v981 = vpop.f32.mrf.mxu0
      %982 = vmatprep.mubr.f32.mxu0 0.0
      %983 = vmatmul.mubr.f32.gmra.mxu0 %v672
      %v984 = vpop.f32.mrf.mxu0
      %v985 = vadd.f32 0.0, %v984
      %v986 = vpop.f32.mrf.mxu0
      %987 = vmatprep.mubr.f32.mxu0 0.0
      %988 = vmatmul.mubr.f32.gmra.mxu0 %v675
      %v989 = vpop.f32.mrf.mxu0
      %v990 = vadd.f32 0.0, %v989
      %v991 = vpop.f32.mrf.mxu0
      %992 = vmatprep.mubr.f32.mxu0 0.0
      %993 = vmatmul.mubr.f32.gmra.mxu0 %v678
      %v994 = vpop.f32.mrf.mxu0
      %v995 = vadd.f32 0.0, %v994
      %v996 = vpop.f32.mrf.mxu0
      %997 = vmatprep.mubr.f32.mxu0 0.0
      %998 = vmatmul.mubr.f32.gmra.mxu0 %v681
      %v999 = vpop.f32.mrf.mxu0
      %v1000 = vadd.f32 0.0, %v999
      %v1001 = vpop.f32.mrf.mxu0
      %1002 = vmatprep.mubr.f32.mxu0 0.0
      %1003 = vmatmul.mubr.f32.gmra.mxu0 %v684
      %v1004 = vpop.f32.mrf.mxu0
      %v1005 = vadd.f32 0.0, %v1004
      %v1006 = vpop.f32.mrf.mxu0
      %1007 = vmatprep.mubr.f32.mxu0 0.0
      %1008 = vmatmul.mubr.f32.gmra.mxu0 %v687
      %v1009 = vpop.f32.mrf.mxu0
      %v1010 = vadd.f32 0.0, %v1009
      %v1011 = vpop.f32.mrf.mxu0
      %1012 = vmatprep.mubr.f32.mxu0 0.0
      %1013 = vmatmul.mubr.f32.gmra.mxu0 %v690
      %v1014 = vpop.f32.mrf.mxu0
      %v1015 = vadd.f32 0.0, %v1014
      %v1016 = vpop.f32.mrf.mxu0
      %1017 = vdwg.mxu0
      %s1018 = scalar_lea.vmem %s150, 408
      %1019 = vst [vmem:[%s1018] sm:$0xff] %v768
      %1020 = vst [vmem:[%s1018 + $0x8] sm:$0xff] %v770
      %1021 = vst [vmem:[%s1018 + $0x10] sm:$0xff] %v935
      %1022 = vst [vmem:[%s1018 + $0x18] sm:$0xff] %v774
      %1023 = vst [vmem:[%s1018 + $0x20] sm:$0xff] %v776
      %1024 = vst [vmem:[%s1018 + $0x28] sm:$0xff] %v940
      %1025 = vst [vmem:[%s1018 + $0x30] sm:$0xff] %v780
      %1026 = vst [vmem:[%s1018 + $0x38] sm:$0xff] %v782
      %1027 = vst [vmem:[%s1018 + $0x40] sm:$0xff] %v945
      %1028 = vst [vmem:[%s1018 + $0x48] sm:$0xff] %v786
      %1029 = vst [vmem:[%s1018 + $0x50] sm:$0xff] %v788
      %1030 = vst [vmem:[%s1018 + $0x58] sm:$0xff] %v950
      %1031 = vst [vmem:[%s1018 + $0x60] sm:$0xff] %v792
      %1032 = vst [vmem:[%s1018 + $0x68] sm:$0xff] %v794
      %1033 = vst [vmem:[%s1018 + $0x70] sm:$0xff] %v955
      %1034 = vst [vmem:[%s1018 + $0x78] sm:$0xff] %v798
      %1035 = vst [vmem:[%s1018 + $0x80] sm:$0xff] %v800
      %1036 = vst [vmem:[%s1018 + $0x88] sm:$0xff] %v960
      %1037 = vst [vmem:[%s1018 + $0x90] sm:$0xff] %v804
      %1038 = vst [vmem:[%s1018 + $0x98] sm:$0xff] %v806
      %1039 = vst [vmem:[%s1018 + $0xa0] sm:$0xff] %v965
      %1040 = vst [vmem:[%s1018 + $0xa8] sm:$0xff] %v810
      %1041 = vst [vmem:[%s1018 + $0xb0] sm:$0xff] %v812
      %1042 = vst [vmem:[%s1018 + $0xb8] sm:$0xff] %v970
      %1043 = vst [vmem:[%s1018 + $0xc0] sm:$0xff] %v816
      %1044 = vst [vmem:[%s1018 + $0xc8] sm:$0xff] %v818
      %1045 = vst [vmem:[%s1018 + $0xd0] sm:$0xff] %v975
      %1046 = vst [vmem:[%s1018 + $0xd8] sm:$0xff] %v822
      %1047 = vst [vmem:[%s1018 + $0xe0] sm:$0xff] %v824
      %1048 = vst [vmem:[%s1018 + $0xe8] sm:$0xff] %v980
      %1049 = vst [vmem:[%s1018 + $0xf0] sm:$0xff] %v828
      %1050 = vst [vmem:[%s1018 + $0xf8] sm:$0xff] %v830
      %1051 = vst [vmem:[%s1018 + $0x100] sm:$0xff] %v985
      %1052 = vst [vmem:[%s1018 + $0x108] sm:$0xff] %v834
      %1053 = vst [vmem:[%s1018 + $0x110] sm:$0xff] %v836
      %1054 = vst [vmem:[%s1018 + $0x118] sm:$0xff] %v990
      %1055 = vst [vmem:[%s1018 + $0x120] sm:$0xff] %v840
      %1056 = vst [vmem:[%s1018 + $0x128] sm:$0xff] %v842
      %1057 = vst [vmem:[%s1018 + $0x130] sm:$0xff] %v995
      %1058 = vst [vmem:[%s1018 + $0x138] sm:$0xff] %v846
      %1059 = vst [vmem:[%s1018 + $0x140] sm:$0xff] %v848
      %1060 = vst [vmem:[%s1018 + $0x148] sm:$0xff] %v1000
      %1061 = vst [vmem:[%s1018 + $0x150] sm:$0xff] %v852
      %1062 = vst [vmem:[%s1018 + $0x158] sm:$0xff] %v854
      %1063 = vst [vmem:[%s1018 + $0x160] sm:$0xff] %v1005
      %1064 = vst [vmem:[%s1018 + $0x168] sm:$0xff] %v858
      %1065 = vst [vmem:[%s1018 + $0x170] sm:$0xff] %v860
      %1066 = vst [vmem:[%s1018 + $0x178] sm:$0xff] %v1010
      %1067 = vst [vmem:[%s1018 + $0x180] sm:$0x7f] %v864
      %1068 = vst [vmem:[%s1018 + $0x188] sm:$0x7f] %v866
      %1069 = vst [vmem:[%s1018 + $0x190] sm:$0x7f] %v1015
      %v1070 = vld [vmem:[%s1] sm:$0xff]
      %v1071 = vld [vmem:[%s1 + $0x8] sm:$0xff]
      %v1072 = vld [vmem:[%s1 + $0x10] sm:$0xff]
      %v1073 = vld [vmem:[%s1 + $0x18] sm:$0xff]
      %v1074 = vld [vmem:[%s1 + $0x20] sm:$0xff]
      %v1075 = vld [vmem:[%s1 + $0x28] sm:$0xff]
      %v1076 = vld [vmem:[%s1 + $0x30] sm:$0xff]
      %v1077 = vld [vmem:[%s1 + $0x38] sm:$0xff]
      %v1078 = vld [vmem:[%s1 + $0x40] sm:$0xff]
      %v1079 = vld [vmem:[%s1 + $0x48] sm:$0xff]
      %v1080 = vld [vmem:[%s1 + $0x50] sm:$0xff]
      %v1081 = vld [vmem:[%s1 + $0x58] sm:$0xff]
      %v1082 = vld [vmem:[%s1 + $0x60] sm:$0xff]
      %v1083 = vld [vmem:[%s1 + $0x68] sm:$0xff]
      %v1084 = vld [vmem:[%s1 + $0x70] sm:$0xff]
      %v1085 = vld [vmem:[%s1 + $0x78] sm:$0xff]
      %v1086 = vld [vmem:[%s1 + $0x80] sm:$0x7f]
      %s1087 = scalar_lea.vmem %s143, 192
      %v1088 = vld [vmem:[%s1087] sm:$0xff]
      %v1089 = vld [vmem:[%s1087 + $0x8] sm:$0xff]
      %v1090 = vld [vmem:[%s1087 + $0x10] sm:$0xff]
      %v1091 = vld [vmem:[%s1087 + $0x18] sm:$0xff]
      %v1092 = vld [vmem:[%s1087 + $0x20] sm:$0xff]
      %v1093 = vld [vmem:[%s1087 + $0x28] sm:$0xff]
      %v1094 = vld [vmem:[%s1087 + $0x30] sm:$0xff]
      %v1095 = vld [vmem:[%s1087 + $0x38] sm:$0xff]
      %v1096 = vld [vmem:[%s1087 + $0x40] sm:$0xff]
      %v1097 = vld [vmem:[%s1087 + $0x48] sm:$0xf]
      %v1098 = vld [vmem:[%s1087 + $0x50] sm:$0xf]
      %v1099 = vld [vmem:[%s1087 + $0x58] sm:$0xf]
      %v1101 = vsel %vm181, %v1070, 0
      %v1104 = vsel %vm181, %v1071, 0
      %v1107 = vsel %vm181, %v1072, 0
      %v1110 = vsel %vm181, %v1073, 0
      %v1113 = vsel %vm181, %v1074, 0
      %v1116 = vsel %vm181, %v1075, 0
      %v1119 = vsel %vm181, %v1076, 0
      %v1122 = vsel %vm181, %v1077, 0
      %v1125 = vsel %vm181, %v1078, 0
      %v1128 = vsel %vm181, %v1079, 0
      %v1131 = vsel %vm181, %v1080, 0
      %v1134 = vsel %vm181, %v1081, 0
      %v1137 = vsel %vm181, %v1082, 0
      %v1140 = vsel %vm181, %v1083, 0
      %v1143 = vsel %vm181, %v1084, 0
      %v1146 = vsel %vm181, %v1085, 0
      %v1149 = vsel %vm181, %v1086, 0
      %v1152 = vsel %vm233, %v1097, 0
      %v1155 = vsel %vm233, %v1098, 0
      %v1158 = vsel %vm233, %v1099, 0
      %1160 = vmatprep.subr.mxu0 0.0
      %1161 = vmatpush1.msra.mxu0 0.0
      %1162 = vmatprep.subr.mxu0 0.0
      %1163 = vmatpush1.msra.mxu0 0.0
      %1164 = vmatprep.subr.mxu0 0.0
      %1165 = vmatpush1.msra.mxu0 0.0
      %1166 = vmatprep.subr.mxu0 0.0
      %1167 = vmatpush1.msra.mxu0 0.0
      %1168 = vmatprep.subr.mxu0 0.0
      %1169 = vmatpush1.msra.mxu0 0.0
      %1170 = vmatprep.subr.mxu0 0.0
      %1171 = vmatpush1.msra.mxu0 0.0
      %1172 = vmatprep.subr.mxu0 0.0
      %1173 = vmatpush1.msra.mxu0 0.0
      %1174 = vmatprep.subr.mxu0 0.0
      %1175 = vmatpush1.msra.mxu0 0.0
      %1176 = vmatprep.subr.mxu0 0.0
      %1177 = vmatpush1.msra.mxu0 0.0
      %1178 = vmatprep.subr.mxu0 0.0
      %1179 = vmatpush1.msra.mxu0 0.0
      %1180 = vmatprep.subr.mxu0 0.0
      %1181 = vmatpush1.msra.mxu0 0.0
      %1182 = vmatprep.subr.mxu0 0.0
      %1183 = vmatpush1.msra.mxu0 0.0
      %1184 = vmatprep.subr.mxu0 %v1155
      %1185 = vmatpush1.msra.mxu0 %v1152
      %1186 = vmatprep.subr.mxu0 %v1095
      %1187 = vmatpush1.msra.mxu0 %v1094
      %1188 = vmatprep.subr.mxu0 %v1092
      %1189 = vmatpush1.msra.mxu0 %v1091
      %1190 = vmatprep.subr.mxu0 %v1089
      %1191 = vmatpush1.msra.mxu0 %v1088
      %1192 = vmatprep.subr.mxu0 0.0
      %1193 = vmatpush2.msra.mxu0 0.0
      %1194 = vmatprep.subr.mxu0 0.0
      %1195 = vmatpush2.msra.mxu0 0.0
      %1196 = vmatprep.subr.mxu0 0.0
      %1197 = vmatpush2.msra.mxu0 0.0
      %1198 = vmatprep.subr.mxu0 0.0
      %1199 = vmatpush2.msra.mxu0 0.0
      %1200 = vmatprep.subr.mxu0 0.0
      %1201 = vmatpush2.msra.mxu0 0.0
      %1202 = vmatprep.subr.mxu0 0.0
      %1203 = vmatpush2.msra.mxu0 0.0
      %1204 = vmatprep.subr.mxu0 0.0
      %1205 = vmatpush2.msra.mxu0 0.0
      %1206 = vmatprep.subr.mxu0 0.0
      %1207 = vmatpush2.msra.mxu0 0.0
      %1208 = vmatprep.subr.mxu0 0.0
      %1209 = vmatpush2.msra.mxu0 0.0
      %1210 = vmatprep.subr.mxu0 0.0
      %1211 = vmatpush2.msra.mxu0 0.0
      %1212 = vmatprep.subr.mxu0 0.0
      %1213 = vmatpush2.msra.mxu0 0.0
      %1214 = vmatprep.subr.mxu0 0.0
      %1215 = vmatpush2.msra.mxu0 0.0
      %1216 = vmatprep.subr.mxu0 0.0
      %1217 = vmatpush2.msra.mxu0 0.0
      %1218 = vmatprep.subr.mxu0 0.0
      %1219 = vmatpush2.msra.mxu0 0.0
      %1220 = vmatprep.subr.mxu0 0.0
      %1221 = vmatpush2.msra.mxu0 0.0
      %1222 = vmatprep.subr.mxu0 0.0
      %1223 = vmatpush2.msra.mxu0 0.0
      %1224 = vmatprep.mubr.f32.mxu0 0.0
      %1225 = vmatmul.mubr.f32.gmra.mxu0 %v1101
      %v1226 = vpop.f32.mrf.mxu0
      %v1227 = vadd.f32 0.0, %v1226
      %v1228 = vpop.f32.mrf.mxu0
      %v1229 = vadd.f32 0.0, %v1228
      %1230 = vmatprep.mubr.f32.mxu0 0.0
      %1231 = vmatmul.mubr.f32.gmra.mxu0 %v1104
      %v1232 = vpop.f32.mrf.mxu0
      %v1233 = vadd.f32 0.0, %v1232
      %v1234 = vpop.f32.mrf.mxu0
      %v1235 = vadd.f32 0.0, %v1234
      %1236 = vmatprep.mubr.f32.mxu0 0.0
      %1237 = vmatmul.mubr.f32.gmra.mxu0 %v1107
      %v1238 = vpop.f32.mrf.mxu0
      %v1239 = vadd.f32 0.0, %v1238
      %v1240 = vpop.f32.mrf.mxu0
      %v1241 = vadd.f32 0.0, %v1240
      %1242 = vmatprep.mubr.f32.mxu0 0.0
      %1243 = vmatmul.mubr.f32.gmra.mxu0 %v1110
      %v1244 = vpop.f32.mrf.mxu0
      %v1245 = vadd.f32 0.0, %v1244
      %v1246 = vpop.f32.mrf.mxu0
      %v1247 = vadd.f32 0.0, %v1246
      %1248 = vmatprep.mubr.f32.mxu0 0.0
      %1249 = vmatmul.mubr.f32.gmra.mxu0 %v1113
      %v1250 = vpop.f32.mrf.mxu0
      %v1251 = vadd.f32 0.0, %v1250
      %v1252 = vpop.f32.mrf.mxu0
      %v1253 = vadd.f32 0.0, %v1252
      %1254 = vmatprep.mubr.f32.mxu0 0.0
      %1255 = vmatmul.mubr.f32.gmra.mxu0 %v1116
      %v1256 = vpop.f32.mrf.mxu0
      %v1257 = vadd.f32 0.0, %v1256
      %v1258 = vpop.f32.mrf.mxu0
      %v1259 = vadd.f32 0.0, %v1258
      %1260 = vmatprep.mubr.f32.mxu0 0.0
      %1261 = vmatmul.mubr.f32.gmra.mxu0 %v1119
      %v1262 = vpop.f32.mrf.mxu0
      %v1263 = vadd.f32 0.0, %v1262
      %v1264 = vpop.f32.mrf.mxu0
      %v1265 = vadd.f32 0.0, %v1264
      %1266 = vmatprep.mubr.f32.mxu0 0.0
      %1267 = vmatmul.mubr.f32.gmra.mxu0 %v1122
      %v1268 = vpop.f32.mrf.mxu0
      %v1269 = vadd.f32 0.0, %v1268
      %v1270 = vpop.f32.mrf.mxu0
      %v1271 = vadd.f32 0.0, %v1270
      %1272 = vmatprep.mubr.f32.mxu0 0.0
      %1273 = vmatmul.mubr.f32.gmra.mxu0 %v1125
      %v1274 = vpop.f32.mrf.mxu0
      %v1275 = vadd.f32 0.0, %v1274
      %v1276 = vpop.f32.mrf.mxu0
      %v1277 = vadd.f32 0.0, %v1276
      %1278 = vmatprep.mubr.f32.mxu0 0.0
      %1279 = vmatmul.mubr.f32.gmra.mxu0 %v1128
      %v1280 = vpop.f32.mrf.mxu0
      %v1281 = vadd.f32 0.0, %v1280
      %v1282 = vpop.f32.mrf.mxu0
      %v1283 = vadd.f32 0.0, %v1282
      %1284 = vmatprep.mubr.f32.mxu0 0.0
      %1285 = vmatmul.mubr.f32.gmra.mxu0 %v1131
      %v1286 = vpop.f32.mrf.mxu0
      %v1287 = vadd.f32 0.0, %v1286
      %v1288 = vpop.f32.mrf.mxu0
      %v1289 = vadd.f32 0.0, %v1288
      %1290 = vmatprep.mubr.f32.mxu0 0.0
      %1291 = vmatmul.mubr.f32.gmra.mxu0 %v1134
      %v1292 = vpop.f32.mrf.mxu0
      %v1293 = vadd.f32 0.0, %v1292
      %v1294 = vpop.f32.mrf.mxu0
      %v1295 = vadd.f32 0.0, %v1294
      %1296 = vmatprep.mubr.f32.mxu0 0.0
      %1297 = vmatmul.mubr.f32.gmra.mxu0 %v1137
      %v1298 = vpop.f32.mrf.mxu0
      %v1299 = vadd.f32 0.0, %v1298
      %v1300 = vpop.f32.mrf.mxu0
      %v1301 = vadd.f32 0.0, %v1300
      %1302 = vmatprep.mubr.f32.mxu0 0.0
      %1303 = vmatmul.mubr.f32.gmra.mxu0 %v1140
      %v1304 = vpop.f32.mrf.mxu0
      %v1305 = vadd.f32 0.0, %v1304
      %v1306 = vpop.f32.mrf.mxu0
      %v1307 = vadd.f32 0.0, %v1306
      %1308 = vmatprep.mubr.f32.mxu0 0.0
      %1309 = vmatmul.mubr.f32.gmra.mxu0 %v1143
      %v1310 = vpop.f32.mrf.mxu0
      %v1311 = vadd.f32 0.0, %v1310
      %v1312 = vpop.f32.mrf.mxu0
      %v1313 = vadd.f32 0.0, %v1312
      %1314 = vmatprep.mubr.f32.mxu0 0.0
      %1315 = vmatmul.mubr.f32.gmra.mxu0 %v1146
      %v1316 = vpop.f32.mrf.mxu0
      %v1317 = vadd.f32 0.0, %v1316
      %v1318 = vpop.f32.mrf.mxu0
      %v1319 = vadd.f32 0.0, %v1318
      %1320 = vmatprep.mubr.f32.mxu0 0.0
      %1321 = vmatmul.mubr.f32.gmra.mxu0 %v1149
      %v1322 = vpop.f32.mrf.mxu0
      %v1323 = vadd.f32 0.0, %v1322
      %v1324 = vpop.f32.mrf.mxu0
      %v1325 = vadd.f32 0.0, %v1324
      %1326 = vdwg.mxu0
      %1327 = vmatprep.subr.mxu0 0.0
      %1328 = vmatpush1.msra.mxu0 0.0
      %1329 = vmatprep.subr.mxu0 0.0
      %1330 = vmatpush1.msra.mxu0 0.0
      %1331 = vmatprep.subr.mxu0 0.0
      %1332 = vmatpush1.msra.mxu0 0.0
      %1333 = vmatprep.subr.mxu0 0.0
      %1334 = vmatpush1.msra.mxu0 0.0
      %1335 = vmatprep.subr.mxu0 0.0
      %1336 = vmatpush1.msra.mxu0 0.0
      %1337 = vmatprep.subr.mxu0 0.0
      %1338 = vmatpush1.msra.mxu0 0.0
      %1339 = vmatprep.subr.mxu0 0.0
      %1340 = vmatpush1.msra.mxu0 0.0
      %1341 = vmatprep.subr.mxu0 0.0
      %1342 = vmatpush1.msra.mxu0 0.0
      %1343 = vmatprep.subr.mxu0 0.0
      %1344 = vmatpush1.msra.mxu0 0.0
      %1345 = vmatprep.subr.mxu0 0.0
      %1346 = vmatpush1.msra.mxu0 0.0
      %1347 = vmatprep.subr.mxu0 0.0
      %1348 = vmatpush1.msra.mxu0 0.0
      %1349 = vmatprep.subr.mxu0 0.0
      %1350 = vmatpush1.msra.mxu0 0.0
      %1351 = vmatprep.subr.mxu0 0.0
      %1352 = vmatpush1.msra.mxu0 %v1158
      %1353 = vmatprep.subr.mxu0 0.0
      %1354 = vmatpush1.msra.mxu0 %v1096
      %1355 = vmatprep.subr.mxu0 0.0
      %1356 = vmatpush1.msra.mxu0 %v1093
      %1357 = vmatprep.subr.mxu0 0.0
      %1358 = vmatpush1.msra.mxu0 %v1090
      %1359 = vmatprep.subr.mxu0 0.0
      %1360 = vmatpush2.msra.mxu0 0.0
      %1361 = vmatprep.subr.mxu0 0.0
      %1362 = vmatpush2.msra.mxu0 0.0
      %1363 = vmatprep.subr.mxu0 0.0
      %1364 = vmatpush2.msra.mxu0 0.0
      %1365 = vmatprep.subr.mxu0 0.0
      %1366 = vmatpush2.msra.mxu0 0.0
      %1367 = vmatprep.subr.mxu0 0.0
      %1368 = vmatpush2.msra.mxu0 0.0
      %1369 = vmatprep.subr.mxu0 0.0
      %1370 = vmatpush2.msra.mxu0 0.0
      %1371 = vmatprep.subr.mxu0 0.0
      %1372 = vmatpush2.msra.mxu0 0.0
      %1373 = vmatprep.subr.mxu0 0.0
      %1374 = vmatpush2.msra.mxu0 0.0
      %1375 = vmatprep.subr.mxu0 0.0
      %1376 = vmatpush2.msra.mxu0 0.0
      %1377 = vmatprep.subr.mxu0 0.0
      %1378 = vmatpush2.msra.mxu0 0.0
      %1379 = vmatprep.subr.mxu0 0.0
      %1380 = vmatpush2.msra.mxu0 0.0
      %1381 = vmatprep.subr.mxu0 0.0
      %1382 = vmatpush2.msra.mxu0 0.0
      %1383 = vmatprep.subr.mxu0 0.0
      %1384 = vmatpush2.msra.mxu0 0.0
      %1385 = vmatprep.subr.mxu0 0.0
      %1386 = vmatpush2.msra.mxu0 0.0
      %1387 = vmatprep.subr.mxu0 0.0
      %1388 = vmatpush2.msra.mxu0 0.0
      %1389 = vmatprep.subr.mxu0 0.0
      %1390 = vmatpush2.msra.mxu0 0.0
      %1391 = vmatprep.mubr.f32.mxu0 0.0
      %1392 = vmatmul.mubr.f32.gmra.mxu0 %v1101
      %v1393 = vpop.f32.mrf.mxu0
      %v1394 = vadd.f32 0.0, %v1393
      %v1395 = vpop.f32.mrf.mxu0
      %1396 = vmatprep.mubr.f32.mxu0 0.0
      %1397 = vmatmul.mubr.f32.gmra.mxu0 %v1104
      %v1398 = vpop.f32.mrf.mxu0
      %v1399 = vadd.f32 0.0, %v1398
      %v1400 = vpop.f32.mrf.mxu0
      %1401 = vmatprep.mubr.f32.mxu0 0.0
      %1402 = vmatmul.mubr.f32.gmra.mxu0 %v1107
      %v1403 = vpop.f32.mrf.mxu0
      %v1404 = vadd.f32 0.0, %v1403
      %v1405 = vpop.f32.mrf.mxu0
      %1406 = vmatprep.mubr.f32.mxu0 0.0
      %1407 = vmatmul.mubr.f32.gmra.mxu0 %v1110
      %v1408 = vpop.f32.mrf.mxu0
      %v1409 = vadd.f32 0.0, %v1408
      %v1410 = vpop.f32.mrf.mxu0
      %1411 = vmatprep.mubr.f32.mxu0 0.0
      %1412 = vmatmul.mubr.f32.gmra.mxu0 %v1113
      %v1413 = vpop.f32.mrf.mxu0
      %v1414 = vadd.f32 0.0, %v1413
      %v1415 = vpop.f32.mrf.mxu0
      %1416 = vmatprep.mubr.f32.mxu0 0.0
      %1417 = vmatmul.mubr.f32.gmra.mxu0 %v1116
      %v1418 = vpop.f32.mrf.mxu0
      %v1419 = vadd.f32 0.0, %v1418
      %v1420 = vpop.f32.mrf.mxu0
      %1421 = vmatprep.mubr.f32.mxu0 0.0
      %1422 = vmatmul.mubr.f32.gmra.mxu0 %v1119
      %v1423 = vpop.f32.mrf.mxu0
      %v1424 = vadd.f32 0.0, %v1423
      %v1425 = vpop.f32.mrf.mxu0
      %1426 = vmatprep.mubr.f32.mxu0 0.0
      %1427 = vmatmul.mubr.f32.gmra.mxu0 %v1122
      %v1428 = vpop.f32.mrf.mxu0
      %v1429 = vadd.f32 0.0, %v1428
      %v1430 = vpop.f32.mrf.mxu0
      %1431 = vmatprep.mubr.f32.mxu0 0.0
      %1432 = vmatmul.mubr.f32.gmra.mxu0 %v1125
      %v1433 = vpop.f32.mrf.mxu0
      %v1434 = vadd.f32 0.0, %v1433
      %v1435 = vpop.f32.mrf.mxu0
      %1436 = vmatprep.mubr.f32.mxu0 0.0
      %1437 = vmatmul.mubr.f32.gmra.mxu0 %v1128
      %v1438 = vpop.f32.mrf.mxu0
      %v1439 = vadd.f32 0.0, %v1438
      %v1440 = vpop.f32.mrf.mxu0
      %1441 = vmatprep.mubr.f32.mxu0 0.0
      %1442 = vmatmul.mubr.f32.gmra.mxu0 %v1131
      %v1443 = vpop.f32.mrf.mxu0
      %v1444 = vadd.f32 0.0, %v1443
      %v1445 = vpop.f32.mrf.mxu0
      %1446 = vmatprep.mubr.f32.mxu0 0.0
      %1447 = vmatmul.mubr.f32.gmra.mxu0 %v1134
      %v1448 = vpop.f32.mrf.mxu0
      %v1449 = vadd.f32 0.0, %v1448
      %v1450 = vpop.f32.mrf.mxu0
      %1451 = vmatprep.mubr.f32.mxu0 0.0
      %1452 = vmatmul.mubr.f32.gmra.mxu0 %v1137
      %v1453 = vpop.f32.mrf.mxu0
      %v1454 = vadd.f32 0.0, %v1453
      %v1455 = vpop.f32.mrf.mxu0
      %1456 = vmatprep.mubr.f32.mxu0 0.0
      %1457 = vmatmul.mubr.f32.gmra.mxu0 %v1140
      %v1458 = vpop.f32.mrf.mxu0
      %v1459 = vadd.f32 0.0, %v1458
      %v1460 = vpop.f32.mrf.mxu0
      %1461 = vmatprep.mubr.f32.mxu0 0.0
      %1462 = vmatmul.mubr.f32.gmra.mxu0 %v1143
      %v1463 = vpop.f32.mrf.mxu0
      %v1464 = vadd.f32 0.0, %v1463
      %v1465 = vpop.f32.mrf.mxu0
      %1466 = vmatprep.mubr.f32.mxu0 0.0
      %1467 = vmatmul.mubr.f32.gmra.mxu0 %v1146
      %v1468 = vpop.f32.mrf.mxu0
      %v1469 = vadd.f32 0.0, %v1468
      %v1470 = vpop.f32.mrf.mxu0
      %1471 = vmatprep.mubr.f32.mxu0 0.0
      %1472 = vmatmul.mubr.f32.gmra.mxu0 %v1149
      %v1473 = vpop.f32.mrf.mxu0
      %v1474 = vadd.f32 0.0, %v1473
      %v1475 = vpop.f32.mrf.mxu0
      %1476 = vdwg.mxu0
      %s1477 = scalar_lea.vmem %s150, 816
      %1478 = vst [vmem:[%s1477] sm:$0xff] %v1227
      %1479 = vst [vmem:[%s1477 + $0x8] sm:$0xff] %v1229
      %1480 = vst [vmem:[%s1477 + $0x10] sm:$0xff] %v1394
      %1481 = vst [vmem:[%s1477 + $0x18] sm:$0xff] %v1233
      %1482 = vst [vmem:[%s1477 + $0x20] sm:$0xff] %v1235
      %1483 = vst [vmem:[%s1477 + $0x28] sm:$0xff] %v1399
      %1484 = vst [vmem:[%s1477 + $0x30] sm:$0xff] %v1239
      %1485 = vst [vmem:[%s1477 + $0x38] sm:$0xff] %v1241
      %1486 = vst [vmem:[%s1477 + $0x40] sm:$0xff] %v1404
      %1487 = vst [vmem:[%s1477 + $0x48] sm:$0xff] %v1245
      %1488 = vst [vmem:[%s1477 + $0x50] sm:$0xff] %v1247
      %1489 = vst [vmem:[%s1477 + $0x58] sm:$0xff] %v1409
      %1490 = vst [vmem:[%s1477 + $0x60] sm:$0xff] %v1251
      %1491 = vst [vmem:[%s1477 + $0x68] sm:$0xff] %v1253
      %1492 = vst [vmem:[%s1477 + $0x70] sm:$0xff] %v1414
      %1493 = vst [vmem:[%s1477 + $0x78] sm:$0xff] %v1257
      %1494 = vst [vmem:[%s1477 + $0x80] sm:$0xff] %v1259
      %1495 = vst [vmem:[%s1477 + $0x88] sm:$0xff] %v1419
      %1496 = vst [vmem:[%s1477 + $0x90] sm:$0xff] %v1263
      %1497 = vst [vmem:[%s1477 + $0x98] sm:$0xff] %v1265
      %1498 = vst [vmem:[%s1477 + $0xa0] sm:$0xff] %v1424
      %1499 = vst [vmem:[%s1477 + $0xa8] sm:$0xff] %v1269
      %1500 = vst [vmem:[%s1477 + $0xb0] sm:$0xff] %v1271
      %1501 = vst [vmem:[%s1477 + $0xb8] sm:$0xff] %v1429
      %1502 = vst [vmem:[%s1477 + $0xc0] sm:$0xff] %v1275
      %1503 = vst [vmem:[%s1477 + $0xc8] sm:$0xff] %v1277
      %1504 = vst [vmem:[%s1477 + $0xd0] sm:$0xff] %v1434
      %1505 = vst [vmem:[%s1477 + $0xd8] sm:$0xff] %v1281
      %1506 = vst [vmem:[%s1477 + $0xe0] sm:$0xff] %v1283
      %1507 = vst [vmem:[%s1477 + $0xe8] sm:$0xff] %v1439
      %1508 = vst [vmem:[%s1477 + $0xf0] sm:$0xff] %v1287
      %1509 = vst [vmem:[%s1477 + $0xf8] sm:$0xff] %v1289
      %1510 = vst [vmem:[%s1477 + $0x100] sm:$0xff] %v1444
      %1511 = vst [vmem:[%s1477 + $0x108] sm:$0xff] %v1293
      %1512 = vst [vmem:[%s1477 + $0x110] sm:$0xff] %v1295
      %1513 = vst [vmem:[%s1477 + $0x118] sm:$0xff] %v1449
      %1514 = vst [vmem:[%s1477 + $0x120] sm:$0xff] %v1299
      %1515 = vst [vmem:[%s1477 + $0x128] sm:$0xff] %v1301
      %1516 = vst [vmem:[%s1477 + $0x130] sm:$0xff] %v1454
      %1517 = vst [vmem:[%s1477 + $0x138] sm:$0xff] %v1305
      %1518 = vst [vmem:[%s1477 + $0x140] sm:$0xff] %v1307
      %1519 = vst [vmem:[%s1477 + $0x148] sm:$0xff] %v1459
      %1520 = vst [vmem:[%s1477 + $0x150] sm:$0xff] %v1311
      %1521 = vst [vmem:[%s1477 + $0x158] sm:$0xff] %v1313
      %1522 = vst [vmem:[%s1477 + $0x160] sm:$0xff] %v1464
      %1523 = vst [vmem:[%s1477 + $0x168] sm:$0xff] %v1317
      %1524 = vst [vmem:[%s1477 + $0x170] sm:$0xff] %v1319
      %1525 = vst [vmem:[%s1477 + $0x178] sm:$0xff] %v1469
      %1526 = vst [vmem:[%s1477 + $0x180] sm:$0x7f] %v1323
      %1527 = vst [vmem:[%s1477 + $0x188] sm:$0x7f] %v1325
      %1528 = vst [vmem:[%s1477 + $0x190] sm:$0x7f] %v1474
      %v1529 = vld [vmem:[%s1] sm:$0xff]
      %v1530 = vld [vmem:[%s1 + $0x8] sm:$0xff]
      %v1531 = vld [vmem:[%s1 + $0x10] sm:$0xff]
      %v1532 = vld [vmem:[%s1 + $0x18] sm:$0xff]
      %v1533 = vld [vmem:[%s1 + $0x20] sm:$0xff]
      %v1534 = vld [vmem:[%s1 + $0x28] sm:$0xff]
      %v1535 = vld [vmem:[%s1 + $0x30] sm:$0xff]
      %v1536 = vld [vmem:[%s1 + $0x38] sm:$0xff]
      %v1537 = vld [vmem:[%s1 + $0x40] sm:$0xff]
      %v1538 = vld [vmem:[%s1 + $0x48] sm:$0xff]
      %v1539 = vld [vmem:[%s1 + $0x50] sm:$0xff]
      %v1540 = vld [vmem:[%s1 + $0x58] sm:$0xff]
      %v1541 = vld [vmem:[%s1 + $0x60] sm:$0xff]
      %v1542 = vld [vmem:[%s1 + $0x68] sm:$0xff]
      %v1543 = vld [vmem:[%s1 + $0x70] sm:$0xff]
      %v1544 = vld [vmem:[%s1 + $0x78] sm:$0xff]
      %v1545 = vld [vmem:[%s1 + $0x80] sm:$0x7f]
      %s1546 = scalar_lea.vmem %s143, 288
      %v1547 = vld [vmem:[%s1546] sm:$0xff]
      %v1548 = vld [vmem:[%s1546 + $0x8] sm:$0xff]
      %v1549 = vld [vmem:[%s1546 + $0x10] sm:$0xff]
      %v1550 = vld [vmem:[%s1546 + $0x18] sm:$0xff]
      %v1551 = vld [vmem:[%s1546 + $0x20] sm:$0xff]
      %v1552 = vld [vmem:[%s1546 + $0x28] sm:$0xff]
      %v1553 = vld [vmem:[%s1546 + $0x30] sm:$0xff]
      %v1554 = vld [vmem:[%s1546 + $0x38] sm:$0xff]
      %v1555 = vld [vmem:[%s1546 + $0x40] sm:$0xff]
      %v1556 = vld [vmem:[%s1546 + $0x48] sm:$0xf]
      %v1557 = vld [vmem:[%s1546 + $0x50] sm:$0xf]
      %v1558 = vld [vmem:[%s1546 + $0x58] sm:$0xf]
      %v1560 = vsel %vm181, %v1529, 0
      %v1563 = vsel %vm181, %v1530, 0
      %v1566 = vsel %vm181, %v1531, 0
      %v1569 = vsel %vm181, %v1532, 0
      %v1572 = vsel %vm181, %v1533, 0
      %v1575 = vsel %vm181, %v1534, 0
      %v1578 = vsel %vm181, %v1535, 0
      %v1581 = vsel %vm181, %v1536, 0
      %v1584 = vsel %vm181, %v1537, 0
      %v1587 = vsel %vm181, %v1538, 0
      %v1590 = vsel %vm181, %v1539, 0
      %v1593 = vsel %vm181, %v1540, 0
      %v1596 = vsel %vm181, %v1541, 0
      %v1599 = vsel %vm181, %v1542, 0
      %v1602 = vsel %vm181, %v1543, 0
      %v1605 = vsel %vm181, %v1544, 0
      %v1608 = vsel %vm181, %v1545, 0
      %v1611 = vsel %vm233, %v1556, 0
      %v1614 = vsel %vm233, %v1557, 0
      %v1617 = vsel %vm233, %v1558, 0
      %1619 = vmatprep.subr.mxu0 0.0
      %1620 = vmatpush1.msra.mxu0 0.0
      %1621 = vmatprep.subr.mxu0 0.0
      %1622 = vmatpush1.msra.mxu0 0.0
      %1623 = vmatprep.subr.mxu0 0.0
      %1624 = vmatpush1.msra.mxu0 0.0
      %1625 = vmatprep.subr.mxu0 0.0
      %1626 = vmatpush1.msra.mxu0 0.0
      %1627 = vmatprep.subr.mxu0 0.0
      %1628 = vmatpush1.msra.mxu0 0.0
      %1629 = vmatprep.subr.mxu0 0.0
      %1630 = vmatpush1.msra.mxu0 0.0
      %1631 = vmatprep.subr.mxu0 0.0
      %1632 = vmatpush1.msra.mxu0 0.0
      %1633 = vmatprep.subr.mxu0 0.0
      %1634 = vmatpush1.msra.mxu0 0.0
      %1635 = vmatprep.subr.mxu0 0.0
      %1636 = vmatpush1.msra.mxu0 0.0
      %1637 = vmatprep.subr.mxu0 0.0
      %1638 = vmatpush1.msra.mxu0 0.0
      %1639 = vmatprep.subr.mxu0 0.0
      %1640 = vmatpush1.msra.mxu0 0.0
      %1641 = vmatprep.subr.mxu0 0.0
      %1642 = vmatpush1.msra.mxu0 0.0
      %1643 = vmatprep.subr.mxu0 %v1614
      %1644 = vmatpush1.msra.mxu0 %v1611
      %1645 = vmatprep.subr.mxu0 %v1554
      %1646 = vmatpush1.msra.mxu0 %v1553
      %1647 = vmatprep.subr.mxu0 %v1551
      %1648 = vmatpush1.msra.mxu0 %v1550
      %1649 = vmatprep.subr.mxu0 %v1548
      %1650 = vmatpush1.msra.mxu0 %v1547
      %1651 = vmatprep.subr.mxu0 0.0
      %1652 = vmatpush2.msra.mxu0 0.0
      %1653 = vmatprep.subr.mxu0 0.0
      %1654 = vmatpush2.msra.mxu0 0.0
      %1655 = vmatprep.subr.mxu0 0.0
      %1656 = vmatpush2.msra.mxu0 0.0
      %1657 = vmatprep.subr.mxu0 0.0
      %1658 = vmatpush2.msra.mxu0 0.0
      %1659 = vmatprep.subr.mxu0 0.0
      %1660 = vmatpush2.msra.mxu0 0.0
      %1661 = vmatprep.subr.mxu0 0.0
      %1662 = vmatpush2.msra.mxu0 0.0
      %1663 = vmatprep.subr.mxu0 0.0
      %1664 = vmatpush2.msra.mxu0 0.0
      %1665 = vmatprep.subr.mxu0 0.0
      %1666 = vmatpush2.msra.mxu0 0.0
      %1667 = vmatprep.subr.mxu0 0.0
      %1668 = vmatpush2.msra.mxu0 0.0
      %1669 = vmatprep.subr.mxu0 0.0
      %1670 = vmatpush2.msra.mxu0 0.0
      %1671 = vmatprep.subr.mxu0 0.0
      %1672 = vmatpush2.msra.mxu0 0.0
      %1673 = vmatprep.subr.mxu0 0.0
      %1674 = vmatpush2.msra.mxu0 0.0
      %1675 = vmatprep.subr.mxu0 0.0
      %1676 = vmatpush2.msra.mxu0 0.0
      %1677 = vmatprep.subr.mxu0 0.0
      %1678 = vmatpush2.msra.mxu0 0.0
      %1679 = vmatprep.subr.mxu0 0.0
      %1680 = vmatpush2.msra.mxu0 0.0
      %1681 = vmatprep.subr.mxu0 0.0
      %1682 = vmatpush2.msra.mxu0 0.0
      %1683 = vmatprep.mubr.f32.mxu0 0.0
      %1684 = vmatmul.mubr.f32.gmra.mxu0 %v1560
      %v1685 = vpop.f32.mrf.mxu0
      %v1686 = vadd.f32 0.0, %v1685
      %v1687 = vpop.f32.mrf.mxu0
      %v1688 = vadd.f32 0.0, %v1687
      %1689 = vmatprep.mubr.f32.mxu0 0.0
      %1690 = vmatmul.mubr.f32.gmra.mxu0 %v1563
      %v1691 = vpop.f32.mrf.mxu0
      %v1692 = vadd.f32 0.0, %v1691
      %v1693 = vpop.f32.mrf.mxu0
      %v1694 = vadd.f32 0.0, %v1693
      %1695 = vmatprep.mubr.f32.mxu0 0.0
      %1696 = vmatmul.mubr.f32.gmra.mxu0 %v1566
      %v1697 = vpop.f32.mrf.mxu0
      %v1698 = vadd.f32 0.0, %v1697
      %v1699 = vpop.f32.mrf.mxu0
      %v1700 = vadd.f32 0.0, %v1699
      %1701 = vmatprep.mubr.f32.mxu0 0.0
      %1702 = vmatmul.mubr.f32.gmra.mxu0 %v1569
      %v1703 = vpop.f32.mrf.mxu0
      %v1704 = vadd.f32 0.0, %v1703
      %v1705 = vpop.f32.mrf.mxu0
      %v1706 = vadd.f32 0.0, %v1705
      %1707 = vmatprep.mubr.f32.mxu0 0.0
      %1708 = vmatmul.mubr.f32.gmra.mxu0 %v1572
      %v1709 = vpop.f32.mrf.mxu0
      %v1710 = vadd.f32 0.0, %v1709
      %v1711 = vpop.f32.mrf.mxu0
      %v1712 = vadd.f32 0.0, %v1711
      %1713 = vmatprep.mubr.f32.mxu0 0.0
      %1714 = vmatmul.mubr.f32.gmra.mxu0 %v1575
      %v1715 = vpop.f32.mrf.mxu0
      %v1716 = vadd.f32 0.0, %v1715
      %v1717 = vpop.f32.mrf.mxu0
      %v1718 = vadd.f32 0.0, %v1717
      %1719 = vmatprep.mubr.f32.mxu0 0.0
      %1720 = vmatmul.mubr.f32.gmra.mxu0 %v1578
      %v1721 = vpop.f32.mrf.mxu0
      %v1722 = vadd.f32 0.0, %v1721
      %v1723 = vpop.f32.mrf.mxu0
      %v1724 = vadd.f32 0.0, %v1723
      %1725 = vmatprep.mubr.f32.mxu0 0.0
      %1726 = vmatmul.mubr.f32.gmra.mxu0 %v1581
      %v1727 = vpop.f32.mrf.mxu0
      %v1728 = vadd.f32 0.0, %v1727
      %v1729 = vpop.f32.mrf.mxu0
      %v1730 = vadd.f32 0.0, %v1729
      %1731 = vmatprep.mubr.f32.mxu0 0.0
      %1732 = vmatmul.mubr.f32.gmra.mxu0 %v1584
      %v1733 = vpop.f32.mrf.mxu0
      %v1734 = vadd.f32 0.0, %v1733
      %v1735 = vpop.f32.mrf.mxu0
      %v1736 = vadd.f32 0.0, %v1735
      %1737 = vmatprep.mubr.f32.mxu0 0.0
      %1738 = vmatmul.mubr.f32.gmra.mxu0 %v1587
      %v1739 = vpop.f32.mrf.mxu0
      %v1740 = vadd.f32 0.0, %v1739
      %v1741 = vpop.f32.mrf.mxu0
      %v1742 = vadd.f32 0.0, %v1741
      %1743 = vmatprep.mubr.f32.mxu0 0.0
      %1744 = vmatmul.mubr.f32.gmra.mxu0 %v1590
      %v1745 = vpop.f32.mrf.mxu0
      %v1746 = vadd.f32 0.0, %v1745
      %v1747 = vpop.f32.mrf.mxu0
      %v1748 = vadd.f32 0.0, %v1747
      %1749 = vmatprep.mubr.f32.mxu0 0.0
      %1750 = vmatmul.mubr.f32.gmra.mxu0 %v1593
      %v1751 = vpop.f32.mrf.mxu0
      %v1752 = vadd.f32 0.0, %v1751
      %v1753 = vpop.f32.mrf.mxu0
      %v1754 = vadd.f32 0.0, %v1753
      %1755 = vmatprep.mubr.f32.mxu0 0.0
      %1756 = vmatmul.mubr.f32.gmra.mxu0 %v1596
      %v1757 = vpop.f32.mrf.mxu0
      %v1758 = vadd.f32 0.0, %v1757
      %v1759 = vpop.f32.mrf.mxu0
      %v1760 = vadd.f32 0.0, %v1759
      %1761 = vmatprep.mubr.f32.mxu0 0.0
      %1762 = vmatmul.mubr.f32.gmra.mxu0 %v1599
      %v1763 = vpop.f32.mrf.mxu0
      %v1764 = vadd.f32 0.0, %v1763
      %v1765 = vpop.f32.mrf.mxu0
      %v1766 = vadd.f32 0.0, %v1765
      %1767 = vmatprep.mubr.f32.mxu0 0.0
      %1768 = vmatmul.mubr.f32.gmra.mxu0 %v1602
      %v1769 = vpop.f32.mrf.mxu0
      %v1770 = vadd.f32 0.0, %v1769
      %v1771 = vpop.f32.mrf.mxu0
      %v1772 = vadd.f32 0.0, %v1771
      %1773 = vmatprep.mubr.f32.mxu0 0.0
      %1774 = vmatmul.mubr.f32.gmra.mxu0 %v1605
      %v1775 = vpop.f32.mrf.mxu0
      %v1776 = vadd.f32 0.0, %v1775
      %v1777 = vpop.f32.mrf.mxu0
      %v1778 = vadd.f32 0.0, %v1777
      %1779 = vmatprep.mubr.f32.mxu0 0.0
      %1780 = vmatmul.mubr.f32.gmra.mxu0 %v1608
      %v1781 = vpop.f32.mrf.mxu0
      %v1782 = vadd.f32 0.0, %v1781
      %v1783 = vpop.f32.mrf.mxu0
      %v1784 = vadd.f32 0.0, %v1783
      %1785 = vdwg.mxu0
      %1786 = vmatprep.subr.mxu0 0.0
      %1787 = vmatpush1.msra.mxu0 0.0
      %1788 = vmatprep.subr.mxu0 0.0
      %1789 = vmatpush1.msra.mxu0 0.0
      %1790 = vmatprep.subr.mxu0 0.0
      %1791 = vmatpush1.msra.mxu0 0.0
      %1792 = vmatprep.subr.mxu0 0.0
      %1793 = vmatpush1.msra.mxu0 0.0
      %1794 = vmatprep.subr.mxu0 0.0
      %1795 = vmatpush1.msra.mxu0 0.0
      %1796 = vmatprep.subr.mxu0 0.0
      %1797 = vmatpush1.msra.mxu0 0.0
      %1798 = vmatprep.subr.mxu0 0.0
      %1799 = vmatpush1.msra.mxu0 0.0
      %1800 = vmatprep.subr.mxu0 0.0
      %1801 = vmatpush1.msra.mxu0 0.0
      %1802 = vmatprep.subr.mxu0 0.0
      %1803 = vmatpush1.msra.mxu0 0.0
      %1804 = vmatprep.subr.mxu0 0.0
      %1805 = vmatpush1.msra.mxu0 0.0
      %1806 = vmatprep.subr.mxu0 0.0
      %1807 = vmatpush1.msra.mxu0 0.0
      %1808 = vmatprep.subr.mxu0 0.0
      %1809 = vmatpush1.msra.mxu0 0.0
      %1810 = vmatprep.subr.mxu0 0.0
      %1811 = vmatpush1.msra.mxu0 %v1617
      %1812 = vmatprep.subr.mxu0 0.0
      %1813 = vmatpush1.msra.mxu0 %v1555
      %1814 = vmatprep.subr.mxu0 0.0
      %1815 = vmatpush1.msra.mxu0 %v1552
      %1816 = vmatprep.subr.mxu0 0.0
      %1817 = vmatpush1.msra.mxu0 %v1549
      %1818 = vmatprep.subr.mxu0 0.0
      %1819 = vmatpush2.msra.mxu0 0.0
      %1820 = vmatprep.subr.mxu0 0.0
      %1821 = vmatpush2.msra.mxu0 0.0
      %1822 = vmatprep.subr.mxu0 0.0
      %1823 = vmatpush2.msra.mxu0 0.0
      %1824 = vmatprep.subr.mxu0 0.0
      %1825 = vmatpush2.msra.mxu0 0.0
      %1826 = vmatprep.subr.mxu0 0.0
      %1827 = vmatpush2.msra.mxu0 0.0
      %1828 = vmatprep.subr.mxu0 0.0
      %1829 = vmatpush2.msra.mxu0 0.0
      %1830 = vmatprep.subr.mxu0 0.0
      %1831 = vmatpush2.msra.mxu0 0.0
      %1832 = vmatprep.subr.mxu0 0.0
      %1833 = vmatpush2.msra.mxu0 0.0
      %1834 = vmatprep.subr.mxu0 0.0
      %1835 = vmatpush2.msra.mxu0 0.0
      %1836 = vmatprep.subr.mxu0 0.0
      %1837 = vmatpush2.msra.mxu0 0.0
      %1838 = vmatprep.subr.mxu0 0.0
      %1839 = vmatpush2.msra.mxu0 0.0
      %1840 = vmatprep.subr.mxu0 0.0
      %1841 = vmatpush2.msra.mxu0 0.0
      %1842 = vmatprep.subr.mxu0 0.0
      %1843 = vmatpush2.msra.mxu0 0.0
      %1844 = vmatprep.subr.mxu0 0.0
      %1845 = vmatpush2.msra.mxu0 0.0
      %1846 = vmatprep.subr.mxu0 0.0
      %1847 = vmatpush2.msra.mxu0 0.0
      %1848 = vmatprep.subr.mxu0 0.0
      %1849 = vmatpush2.msra.mxu0 0.0
      %1850 = vmatprep.mubr.f32.mxu0 0.0
      %1851 = vmatmul.mubr.f32.gmra.mxu0 %v1560
      %v1852 = vpop.f32.mrf.mxu0
      %v1853 = vadd.f32 0.0, %v1852
      %v1854 = vpop.f32.mrf.mxu0
      %1855 = vmatprep.mubr.f32.mxu0 0.0
      %1856 = vmatmul.mubr.f32.gmra.mxu0 %v1563
      %v1857 = vpop.f32.mrf.mxu0
      %v1858 = vadd.f32 0.0, %v1857
      %v1859 = vpop.f32.mrf.mxu0
      %1860 = vmatprep.mubr.f32.mxu0 0.0
      %1861 = vmatmul.mubr.f32.gmra.mxu0 %v1566
      %v1862 = vpop.f32.mrf.mxu0
      %v1863 = vadd.f32 0.0, %v1862
      %v1864 = vpop.f32.mrf.mxu0
      %1865 = vmatprep.mubr.f32.mxu0 0.0
      %1866 = vmatmul.mubr.f32.gmra.mxu0 %v1569
      %v1867 = vpop.f32.mrf.mxu0
      %v1868 = vadd.f32 0.0, %v1867
      %v1869 = vpop.f32.mrf.mxu0
      %1870 = vmatprep.mubr.f32.mxu0 0.0
      %1871 = vmatmul.mubr.f32.gmra.mxu0 %v1572
      %v1872 = vpop.f32.mrf.mxu0
      %v1873 = vadd.f32 0.0, %v1872
      %v1874 = vpop.f32.mrf.mxu0
      %1875 = vmatprep.mubr.f32.mxu0 0.0
      %1876 = vmatmul.mubr.f32.gmra.mxu0 %v1575
      %v1877 = vpop.f32.mrf.mxu0
      %v1878 = vadd.f32 0.0, %v1877
      %v1879 = vpop.f32.mrf.mxu0
      %1880 = vmatprep.mubr.f32.mxu0 0.0
      %1881 = vmatmul.mubr.f32.gmra.mxu0 %v1578
      %v1882 = vpop.f32.mrf.mxu0
      %v1883 = vadd.f32 0.0, %v1882
      %v1884 = vpop.f32.mrf.mxu0
      %1885 = vmatprep.mubr.f32.mxu0 0.0
      %1886 = vmatmul.mubr.f32.gmra.mxu0 %v1581
      %v1887 = vpop.f32.mrf.mxu0
      %v1888 = vadd.f32 0.0, %v1887
      %v1889 = vpop.f32.mrf.mxu0
      %1890 = vmatprep.mubr.f32.mxu0 0.0
      %1891 = vmatmul.mubr.f32.gmra.mxu0 %v1584
      %v1892 = vpop.f32.mrf.mxu0
      %v1893 = vadd.f32 0.0, %v1892
      %v1894 = vpop.f32.mrf.mxu0
      %1895 = vmatprep.mubr.f32.mxu0 0.0
      %1896 = vmatmul.mubr.f32.gmra.mxu0 %v1587
      %v1897 = vpop.f32.mrf.mxu0
      %v1898 = vadd.f32 0.0, %v1897
      %v1899 = vpop.f32.mrf.mxu0
      %1900 = vmatprep.mubr.f32.mxu0 0.0
      %1901 = vmatmul.mubr.f32.gmra.mxu0 %v1590
      %v1902 = vpop.f32.mrf.mxu0
      %v1903 = vadd.f32 0.0, %v1902
      %v1904 = vpop.f32.mrf.mxu0
      %1905 = vmatprep.mubr.f32.mxu0 0.0
      %1906 = vmatmul.mubr.f32.gmra.mxu0 %v1593
      %v1907 = vpop.f32.mrf.mxu0
      %v1908 = vadd.f32 0.0, %v1907
      %v1909 = vpop.f32.mrf.mxu0
      %1910 = vmatprep.mubr.f32.mxu0 0.0
      %1911 = vmatmul.mubr.f32.gmra.mxu0 %v1596
      %v1912 = vpop.f32.mrf.mxu0
      %v1913 = vadd.f32 0.0, %v1912
      %v1914 = vpop.f32.mrf.mxu0
      %1915 = vmatprep.mubr.f32.mxu0 0.0
      %1916 = vmatmul.mubr.f32.gmra.mxu0 %v1599
      %v1917 = vpop.f32.mrf.mxu0
      %v1918 = vadd.f32 0.0, %v1917
      %v1919 = vpop.f32.mrf.mxu0
      %1920 = vmatprep.mubr.f32.mxu0 0.0
      %1921 = vmatmul.mubr.f32.gmra.mxu0 %v1602
      %v1922 = vpop.f32.mrf.mxu0
      %v1923 = vadd.f32 0.0, %v1922
      %v1924 = vpop.f32.mrf.mxu0
      %1925 = vmatprep.mubr.f32.mxu0 0.0
      %1926 = vmatmul.mubr.f32.gmra.mxu0 %v1605
      %v1927 = vpop.f32.mrf.mxu0
      %v1928 = vadd.f32 0.0, %v1927
      %v1929 = vpop.f32.mrf.mxu0
      %1930 = vmatprep.mubr.f32.mxu0 0.0
      %1931 = vmatmul.mubr.f32.gmra.mxu0 %v1608
      %v1932 = vpop.f32.mrf.mxu0
      %v1933 = vadd.f32 0.0, %v1932
      %v1934 = vpop.f32.mrf.mxu0
      %1935 = vdwg.mxu0
      %s1936 = scalar_lea.vmem %s150, 1224
      %1937 = vst [vmem:[%s1936] sm:$0xff] %v1686
      %1938 = vst [vmem:[%s1936 + $0x8] sm:$0xff] %v1688
      %1939 = vst [vmem:[%s1936 + $0x10] sm:$0xff] %v1853
      %1940 = vst [vmem:[%s1936 + $0x18] sm:$0xff] %v1692
      %1941 = vst [vmem:[%s1936 + $0x20] sm:$0xff] %v1694
      %1942 = vst [vmem:[%s1936 + $0x28] sm:$0xff] %v1858
      %1943 = vst [vmem:[%s1936 + $0x30] sm:$0xff] %v1698
      %1944 = vst [vmem:[%s1936 + $0x38] sm:$0xff] %v1700
      %1945 = vst [vmem:[%s1936 + $0x40] sm:$0xff] %v1863
      %1946 = vst [vmem:[%s1936 + $0x48] sm:$0xff] %v1704
      %1947 = vst [vmem:[%s1936 + $0x50] sm:$0xff] %v1706
      %1948 = vst [vmem:[%s1936 + $0x58] sm:$0xff] %v1868
      %1949 = vst [vmem:[%s1936 + $0x60] sm:$0xff] %v1710
      %1950 = vst [vmem:[%s1936 + $0x68] sm:$0xff] %v1712
      %1951 = vst [vmem:[%s1936 + $0x70] sm:$0xff] %v1873
      %1952 = vst [vmem:[%s1936 + $0x78] sm:$0xff] %v1716
      %1953 = vst [vmem:[%s1936 + $0x80] sm:$0xff] %v1718
      %1954 = vst [vmem:[%s1936 + $0x88] sm:$0xff] %v1878
      %1955 = vst [vmem:[%s1936 + $0x90] sm:$0xff] %v1722
      %1956 = vst [vmem:[%s1936 + $0x98] sm:$0xff] %v1724
      %1957 = vst [vmem:[%s1936 + $0xa0] sm:$0xff] %v1883
      %1958 = vst [vmem:[%s1936 + $0xa8] sm:$0xff] %v1728
      %1959 = vst [vmem:[%s1936 + $0xb0] sm:$0xff] %v1730
      %1960 = vst [vmem:[%s1936 + $0xb8] sm:$0xff] %v1888
      %1961 = vst [vmem:[%s1936 + $0xc0] sm:$0xff] %v1734
      %1962 = vst [vmem:[%s1936 + $0xc8] sm:$0xff] %v1736
      %1963 = vst [vmem:[%s1936 + $0xd0] sm:$0xff] %v1893
      %1964 = vst [vmem:[%s1936 + $0xd8] sm:$0xff] %v1740
      %1965 = vst [vmem:[%s1936 + $0xe0] sm:$0xff] %v1742
      %1966 = vst [vmem:[%s1936 + $0xe8] sm:$0xff] %v1898
      %1967 = vst [vmem:[%s1936 + $0xf0] sm:$0xff] %v1746
      %1968 = vst [vmem:[%s1936 + $0xf8] sm:$0xff] %v1748
      %1969 = vst [vmem:[%s1936 + $0x100] sm:$0xff] %v1903
      %1970 = vst [vmem:[%s1936 + $0x108] sm:$0xff] %v1752
      %1971 = vst [vmem:[%s1936 + $0x110] sm:$0xff] %v1754
      %1972 = vst [vmem:[%s1936 + $0x118] sm:$0xff] %v1908
      %1973 = vst [vmem:[%s1936 + $0x120] sm:$0xff] %v1758
      %1974 = vst [vmem:[%s1936 + $0x128] sm:$0xff] %v1760
      %1975 = vst [vmem:[%s1936 + $0x130] sm:$0xff] %v1913
      %1976 = vst [vmem:[%s1936 + $0x138] sm:$0xff] %v1764
      %1977 = vst [vmem:[%s1936 + $0x140] sm:$0xff] %v1766
      %1978 = vst [vmem:[%s1936 + $0x148] sm:$0xff] %v1918
      %1979 = vst [vmem:[%s1936 + $0x150] sm:$0xff] %v1770
      %1980 = vst [vmem:[%s1936 + $0x158] sm:$0xff] %v1772
      %1981 = vst [vmem:[%s1936 + $0x160] sm:$0xff] %v1923
      %1982 = vst [vmem:[%s1936 + $0x168] sm:$0xff] %v1776
      %1983 = vst [vmem:[%s1936 + $0x170] sm:$0xff] %v1778
      %1984 = vst [vmem:[%s1936 + $0x178] sm:$0xff] %v1928
      %1985 = vst [vmem:[%s1936 + $0x180] sm:$0x7f] %v1782
      %1986 = vst [vmem:[%s1936 + $0x188] sm:$0x7f] %v1784
      %1987 = vst [vmem:[%s1936 + $0x190] sm:$0x7f] %v1933
      %s1988 = smul.u32 4, %s13
      %p1989 = scmp.lt.s32.totalorder %s1988, 7
      %s1990 = scalar_select %p1989, %s1988, 7
      %s1991 = smul.addr %s1990, 51
      %s1992 = smul.addr %s1991, 8
      %s1993 = scalar_lea.vmem %s2, %s1992
      // Predicated region
      $region29: #{model_forward.1} parent=27 // pred_check
        %p1994 = pneg %p78
      $region30: #{model_forward.1} parent=27 // pred_check_branch
        %1996 = sbr.rel (%p1994) target = $region32
      $region31: #{model_forward.1} parent=27 // pred_region
        %s1997 = smul.u32 4, %s13
      $region32: #{model_forward.1} parent=27 // pred_fallthru
        _
    $region28: #{model_forward.1} parent=5 // pred_fallthru
      _
    %p1998 = scmp.le.s32.totalorder 2, %s8
    // Predicated region
    $region33: #{model_forward.1} parent=5 // pred_check
      %p1999 = pneg %p1998
    $region34: #{model_forward.1} parent=5 // pred_check_branch
      %2001 = sbr.rel (%p1999) target = $region36
    $region35: #{model_forward.1} parent=5 // pred_region
      %s2002 = ssub.s32 %s8, 2
      // Predicated region
      $region37: #{model_forward.1} parent=35 // pred_check
        %p2003 = pneg %p84
      $region38: #{model_forward.1} parent=35 // pred_check_branch
        %2005 = sbr.rel (%p2003) target = $region40
      $region39: #{model_forward.1} parent=35 // pred_region
        %s2006 = smul.u32 4, %s14
        %p2007 = scmp.lt.s32.totalorder %s2006, 7
        %s2008 = scalar_select %p2007, %s2006, 7
        %s2009 = smul.addr %s2008, 51
        %s2010 = smul.addr %s2009, 8
        %s2011 = scalar_lea.vmem %s2, %s2010
      $region40: #{model_forward.1} parent=35 // pred_fallthru
        _
    $region36: #{model_forward.1} parent=5 // pred_fallthru
      _
  $region6: #{model_forward.1} parent=0 // loop_footer
    %s12 = sadd.s32 1, %s8
  $region7: #{model_forward.1} parent=0 // loop_footer_branch
    %7 = sbr.rel target = $region3
  $region8: #{model_forward.1} parent=0 // loop_exit
    _

</llo_original>
